<compile_context>
chip_gen: v7x
topology: tpu7x:2x2x1
jax: 0.10.0
libtpu: 0.0.40
codegen_flags: <defaults>
</compile_context>

<pallas_src>
import functools

import jax
import jax.numpy as jnp
import numpy as np
from jax import lax
from jax.experimental import pallas as pl
from jax.experimental.pallas import tpu as pltpu

# ----------------------------- problem sizes -------------------------------
B = 2          # batch (example pairs)
CIN = 4        # image channels
H = W = 16     # spatial
ECON = 4       # econ feature dim
COUT = 8       # level-model conv channels
HIDDEN = 32    # MLP hidden size (module default is 128; small for the demo)
KK = CIN * 9   # im2col patch feature dim
P = H * W      # spatial positions per image
LANES = 128    # lane width for the packed-parameter slab / lane-dense output

# Pairs batched per grid step: amortizes the ~0.35 us per-step overhead and
# grows the conv matmul M dim (the only free MXU axis; K=36, N=8 are tiny).
# Per-step double-buffered patch footprint = 2 * pairs * 2P * KK * 4 B
# (pairs=8 -> ~1.2 MiB), comfortably inside even v7x's smaller VMEM.
PAIRS_PER_STEP = 8
# Set to 2 on v7x so both TensorCores get work; on v5e/v6e (1 TC) leave at 1
# so small batches collapse to a single grid step.
MIN_GRID_STEPS = 1

assert COUT <= LANES and ECON <= LANES and HIDDEN <= LANES


# ------------------------------ Pallas kernel ------------------------------
def diff_kernel(patches_ref, econ_ref, pool_ref, conv_w_ref, slab_ref, out_ref,
                *, pairs):
    """One grid step = `pairs` example-pairs.

    patches_ref : (1, 2*pairs*P, KK)  rows [0, pairs*P)      -> img1 patches
                                      rows [pairs*P, 2*...*P) -> img2 patches
    econ_ref    : (B_pad, ECON)        resident; sliced per step with pl.ds
    pool_ref    : (2*pairs, 2*pairs*P) resident constant block-pooling matrix
    conv_w_ref  : (KK, COUT)           resident
    slab_ref    : (8, LANES)           resident packed small params
    out_ref     : (1, pairs, LANES)    lane-dense output (wrapper takes lane 0)
    """
    i = pl.program_id(0)
    patches = patches_ref[0]                      # (2*pairs*P, KK)
    conv_w = conv_w_ref[...]                      # (KK, COUT)
    slab = slab_ref[...]                          # (8, LANES)
    start = pl.multiple_of(i * pairs, pairs)
    econ = econ_ref[pl.ds(start, pairs), :]       # (pairs, ECON)

    conv_b  = slab[0:1, 0:COUT]                   # (1, COUT)
    head_wi = slab[1:2, 0:COUT]                   # (1, COUT)  head weights, pooled
    head_we = slab[2:3, 0:ECON]                   # (1, ECON)  head weights, econ
    head_b  = slab[3:4, 0:1]                      # (1, 1)
    b2      = slab[3:4, 1:2]                      # (1, 1)
    w1a     = slab[4:5, 0:HIDDEN]                 # (1, HIDDEN) MLP w1 row for out1
    w1b     = slab[5:6, 0:HIDDEN]                 # (1, HIDDEN) MLP w1 row for out2
    b1      = slab[6:7, 0:HIDDEN]                 # (1, HIDDEN)
    w2      = slab[7:8, 0:HIDDEN]                 # (1, HIDDEN)

    # conv-as-matmul for all 2*pairs images of this step in ONE MXU matmul.
    # (bf16 operand cast here is the v6e/v7x throughput knob; kept f32 to meet
    #  the 1e-4 reference tolerance.)
    co = jnp.dot(patches, conv_w, preferred_element_type=jnp.float32)  # (2*pairs*P, COUT)
    co = jnp.maximum(co + conv_b, 0.0)                                 # bias + ReLU

    # Global average pool for all images at once against the resident constant
    # pooling matrix (no per-step iota/where construction on the VPU).
    pooled = jnp.dot(pool_ref[...], co,
                     preferred_element_type=jnp.float32)               # (2*pairs, COUT)

    # Level-model head on concat([pooled, econ]) as split VPU broadcast-mul +
    # lane reductions (no degenerate N=1 matmuls).
    lvl = jnp.sum(pooled * head_wi, axis=1, keepdims=True)             # (2*pairs, 1)
    econ_term = jnp.sum(econ * head_we, axis=1, keepdims=True) + head_b  # (pairs, 1)
    out1 = lvl[:pairs, :] + econ_term                                  # (pairs, 1)
    out2 = lvl[pairs:, :] + econ_term                                  # (pairs, 1)

    # MLP(2 -> HIDDEN -> 1): scalar-times-row + lane reduce (VPU only).
    h = jnp.maximum(out1 * w1a + out2 * w1b + b1, 0.0)                 # (pairs, HIDDEN)
    y = jnp.sum(h * w2, axis=1, keepdims=True) + b2                    # (pairs, 1)

    # Lane-dense store (one writeback per step); wrapper takes lane 0.
    out_ref[0] = jnp.broadcast_to(y, (pairs, LANES))


# ------------------------------- JAX glue ----------------------------------
def im2col_3x3_pad1(x):
    """x: (N, C, H, W) -> (N, H*W, C*9) matching PyTorch conv2d(pad=1) ordering."""
    n, c, h, w = x.shape
    xp = jnp.pad(x, ((0, 0), (0, 0), (1, 1), (1, 1)))
    shifts = [xp[:, :, di:di + h, dj:dj + w] for di in range(3) for dj in range(3)]
    p = jnp.stack(shifts, axis=2)                 # (N, C, 9, H, W)
    p = p.transpose(0, 3, 4, 1, 2)                # (N, H, W, C, 9)
    return p.reshape(n, h * w, c * 9)


def pack_small_params(params):
    """Pack all sub-tile parameters into one (8, LANES) slab (host-side numpy)."""
    slab = np.zeros((8, LANES), np.float32)
    slab[0, :COUT] = np.asarray(params['conv_b'])
    slab[1, :COUT] = np.asarray(params['head_w'][:COUT, 0])
    slab[2, :ECON] = np.asarray(params['head_w'][COUT:, 0])
    slab[3, 0] = float(params['head_b'][0])
    slab[3, 1] = float(params['b2'][0])
    slab[4, :HIDDEN] = np.asarray(params['w1'][0])
    slab[5, :HIDDEN] = np.asarray(params['w1'][1])
    slab[6, :HIDDEN] = np.asarray(params['b1'])
    slab[7, :HIDDEN] = np.asarray(params['w2'][:, 0])
    return jnp.asarray(slab)


def prepare_params(params):
    """Static parameter prep: run ONCE, hoisted out of the per-call path."""
    conv_w2d = jnp.asarray(
        np.ascontiguousarray(np.asarray(params['conv_w']).reshape(COUT, KK).T))
    slab = pack_small_params(params)
    return conv_w2d, slab


@jax.jit
def diff_from_level_forward(img1, img2, econ, conv_w2d, slab):
    b = img1.shape[0]
    pairs = max(1, min(PAIRS_PER_STEP, -(-b // MIN_GRID_STEPS)))
    nsteps = -(-b // pairs)
    b_pad = nsteps * pairs
    pad = b_pad - b
    if pad:
        img1 = jnp.pad(img1, ((0, pad), (0, 0), (0, 0), (0, 0)))
        img2 = jnp.pad(img2, ((0, pad), (0, 0), (0, 0), (0, 0)))
        econ = jnp.pad(econ, ((0, pad), (0, 0)))

    # Single im2col pass over all images; per-step block has img1 rows of the
    # step's pairs first, then img2 rows (keeps out1/out2 as contiguous slices).
    imgs = jnp.concatenate([img1, img2], axis=0)              # (2*B_pad, C, H, W)
    patches_all = im2col_3x3_pad1(imgs)                       # (2*B_pad, P, KK)
    p1 = patches_all[:b_pad].reshape(nsteps, pairs * P, KK)
    p2 = patches_all[b_pad:].reshape(nsteps, pairs * P, KK)
    patches = jnp.concatenate([p1, p2], axis=1)               # (nsteps, 2*pairs*P, KK)

    # Constant block-pooling matrix (built at trace time, resident in VMEM).
    pool = jnp.asarray(np.kron(np.eye(2 * pairs, dtype=np.float32),
                               np.full((1, P), 1.0 / P, np.float32)))

    kernel = functools.partial(diff_kernel, pairs=pairs)
    out = pl.pallas_call(
        kernel,
        out_shape=jax.ShapeDtypeStruct((nsteps, pairs, LANES), jnp.float32),
        grid=(nsteps,),
        in_specs=[
            pl.BlockSpec((1, 2 * pairs * P, KK), lambda i: (i, 0, 0)),   # per-step patches
            pl.BlockSpec((b_pad, ECON), lambda i: (0, 0)),               # resident econ
            pl.BlockSpec((2 * pairs, 2 * pairs * P), lambda i: (0, 0)),  # resident pool
            pl.BlockSpec((KK, COUT), lambda i: (0, 0)),                  # resident conv w
            pl.BlockSpec((8, LANES), lambda i: (0, 0)),                  # packed params
        ],
        out_specs=pl.BlockSpec((1, pairs, LANES), lambda i: (i, 0, 0)),
        compiler_params=pltpu.CompilerParams(
            dimension_semantics=("parallel",)),
    )(patches, econ, pool, conv_w2d, slab)

    return out.reshape(b_pad, LANES)[:b, 0:1]                            # (B, 1)


# --------------------------- pure-JAX reference -----------------------------
def reference_forward(img1, img2, econ, params):
    def level(img):
        co = lax.conv_general_dilated(
            img, params['conv_w'], (1, 1), 'SAME',
            dimension_numbers=('NCHW', 'OIHW', 'NCHW'))
        co = jax.nn.relu(co + params['conv_b'][None, :, None, None])
        pooled = jnp.mean(co, axis=(2, 3))
        feat = jnp.concatenate([pooled, econ], axis=1)
        return feat @ params['head_w'] + params['head_b']

    out1 = level(img1)
    out2 = level(img2)
    combined = jnp.concatenate([out1, out2], axis=1)
    h = jax.nn.relu(combined @ params['w1'] + params['b1'])
    return h @ params['w2'] + params['b2']


# ---------------------------------- main ------------------------------------
if __name__ == "__main__":
    key = jax.random.PRNGKey(0)
    ks = jax.random.split(key, 11)

    img1 = jax.random.normal(ks[0], (B, CIN, H, W), jnp.float32)
    img2 = jax.random.normal(ks[1], (B, CIN, H, W), jnp.float32)
    econ = jax.random.normal(ks[2], (B, ECON), jnp.float32)

    params = {
        'conv_w': jax.random.normal(ks[3], (COUT, CIN, 3, 3), jnp.float32) * 0.1,
        'conv_b': jax.random.normal(ks[4], (COUT,), jnp.float32) * 0.1,
        'head_w': jax.random.normal(ks[5], (COUT + ECON, 1), jnp.float32) * 0.1,
        'head_b': jax.random.normal(ks[6], (1,), jnp.float32) * 0.1,
        'w1': jax.random.normal(ks[7], (2, HIDDEN), jnp.float32) * 0.1,
        'b1': jax.random.normal(ks[8], (HIDDEN,), jnp.float32) * 0.1,
        'w2': jax.random.normal(ks[9], (HIDDEN, 1), jnp.float32) * 0.1,
        'b2': jax.random.normal(ks[10], (1,), jnp.float32) * 0.1,
    }

    # Static param prep (packing + conv-weight transpose) done once, not per call.
    conv_w2d, slab = prepare_params(params)

    out = diff_from_level_forward(img1, img2, econ, conv_w2d, slab)
    out = jax.block_until_ready(out)

    ref = reference_forward(img1, img2, econ, params)
    ref = jax.block_until_ready(ref)

    assert out.shape == (B, 1), out.shape
    np.testing.assert_allclose(np.asarray(out), np.asarray(ref),
                               rtol=1e-4, atol=1e-4)
    print("KERNEL_OK")
</pallas_src>

<mosaic_0001>
module attributes {stable_mosaic.version = 11 : i64} {
  func.func @diff_kernel(%arg0: i32, %arg1: memref<1x1024x36xf32, #tpu.memory_space<vmem>>, %arg2: memref<2x4xf32, #tpu.memory_space<vmem>>, %arg3: memref<4x1024xf32, #tpu.memory_space<vmem>>, %arg4: memref<36x8xf32, #tpu.memory_space<vmem>>, %arg5: memref<8x128xf32, #tpu.memory_space<vmem>>, %arg6: memref<1x2x128xf32, #tpu.memory_space<vmem>>) attributes {dimension_semantics = [#tpu.dimension_semantics<parallel>], iteration_bounds = array<i64: 1>, scalar_prefetch = 0 : i64, scratch_operands = 0 : i64, tpu.core_type = #tpu.core_type<tc>, window_params = [{transform_indices = @transform_0, window_bounds = array<i64: 1, 1024, 36>}, {pipeline_mode = #tpu.pipeline_mode<synchronous>, transform_indices = @transform_1, window_bounds = array<i64: 2, 4>}, {pipeline_mode = #tpu.pipeline_mode<synchronous>, transform_indices = @transform_2, window_bounds = array<i64: 4, 1024>}, {pipeline_mode = #tpu.pipeline_mode<synchronous>, transform_indices = @transform_3, window_bounds = array<i64: 36, 8>}, {pipeline_mode = #tpu.pipeline_mode<synchronous>, transform_indices = @transform_4, window_bounds = array<i64: 8, 128>}, {transform_indices = @transform_5, window_bounds = array<i64: 1, 2, 128>}]} {
    %c0 = arith.constant 0 : index
    %c0_0 = arith.constant 0 : index
    %c0_1 = arith.constant 0 : index
    %0 = vector.load %arg1[%c0, %c0_0, %c0_1] : memref<1x1024x36xf32, #tpu.memory_space<vmem>>, vector<1x1024x36xf32>
    %1 = vector.shape_cast %0 : vector<1x1024x36xf32> to vector<1024x36xf32>
    %c0_2 = arith.constant 0 : index
    %c0_3 = arith.constant 0 : index
    %2 = vector.load %arg4[%c0_2, %c0_3] : memref<36x8xf32, #tpu.memory_space<vmem>>, vector<36x8xf32>
    %c0_4 = arith.constant 0 : index
    %c0_5 = arith.constant 0 : index
    %3 = vector.load %arg5[%c0_4, %c0_5] : memref<8x128xf32, #tpu.memory_space<vmem>>, vector<8x128xf32>
    %c2_i32 = arith.constant 2 : i32
    %4 = arith.muli %arg0, %c2_i32 : i32
    %5 = tpu.assume_multiple %4, 2 : i32
    %6 = arith.index_cast %5 : i32 to index
    %c0_6 = arith.constant 0 : index
    %7 = vector.load %arg2[%6, %c0_6] : memref<2x4xf32, #tpu.memory_space<vmem>>, vector<2x4xf32>
    %8 = vector.extract_strided_slice %3 {offsets = [0, 0], sizes = [1, 8], strides = [1, 1]} : vector<8x128xf32> to vector<1x8xf32>
    %9 = vector.extract_strided_slice %3 {offsets = [1, 0], sizes = [1, 8], strides = [1, 1]} : vector<8x128xf32> to vector<1x8xf32>
    %10 = vector.extract_strided_slice %3 {offsets = [2, 0], sizes = [1, 4], strides = [1, 1]} : vector<8x128xf32> to vector<1x4xf32>
    %11 = vector.extract_strided_slice %3 {offsets = [3, 0], sizes = [1, 1], strides = [1, 1]} : vector<8x128xf32> to vector<1x1xf32>
    %12 = vector.extract_strided_slice %3 {offsets = [3, 1], sizes = [1, 1], strides = [1, 1]} : vector<8x128xf32> to vector<1x1xf32>
    %13 = vector.extract_strided_slice %3 {offsets = [4, 0], sizes = [1, 32], strides = [1, 1]} : vector<8x128xf32> to vector<1x32xf32>
    %14 = vector.extract_strided_slice %3 {offsets = [5, 0], sizes = [1, 32], strides = [1, 1]} : vector<8x128xf32> to vector<1x32xf32>
    %15 = vector.extract_strided_slice %3 {offsets = [6, 0], sizes = [1, 32], strides = [1, 1]} : vector<8x128xf32> to vector<1x32xf32>
    %16 = vector.extract_strided_slice %3 {offsets = [7, 0], sizes = [1, 32], strides = [1, 1]} : vector<8x128xf32> to vector<1x32xf32>
    %cst = arith.constant dense<0.000000e+00> : vector<1024x8xf32>
    %17 = tpu.matmul %1, %2, %cst {dimension_numbers = #tpu.dot_dimension_numbers<[1], [0], [0], [1], [0, 0, 1, 1], [], []>} : vector<1024x36xf32>, vector<36x8xf32>, vector<1024x8xf32> -> vector<1024x8xf32>
    %18 = vector.broadcast %8 : vector<1x8xf32> to vector<1024x8xf32>
    %19 = arith.addf %17, %18 : vector<1024x8xf32>
    %cst_7 = arith.constant 0.000000e+00 : f32
    %20 = vector.broadcast %cst_7 : f32 to vector<1024x8xf32>
    %21 = arith.maximumf %19, %20 : vector<1024x8xf32>
    %c0_8 = arith.constant 0 : index
    %c0_9 = arith.constant 0 : index
    %22 = vector.load %arg3[%c0_8, %c0_9] : memref<4x1024xf32, #tpu.memory_space<vmem>>, vector<4x1024xf32>
    %cst_10 = arith.constant dense<0.000000e+00> : vector<4x8xf32>
    %23 = tpu.matmul %22, %21, %cst_10 {dimension_numbers = #tpu.dot_dimension_numbers<[1], [0], [0], [1], [0, 0, 1, 1], [], []>} : vector<4x1024xf32>, vector<1024x8xf32>, vector<4x8xf32> -> vector<4x8xf32>
    %24 = vector.broadcast %9 : vector<1x8xf32> to vector<4x8xf32>
    %25 = arith.mulf %23, %24 : vector<4x8xf32>
    %cst_11 = arith.constant dense<0.000000e+00> : vector<4xf32>
    %26 = vector.multi_reduction <add>, %25, %cst_11 [1] : vector<4x8xf32> to vector<4xf32>
    %27 = vector.shape_cast %26 : vector<4xf32> to vector<4x1xf32>
    %28 = vector.broadcast %10 : vector<1x4xf32> to vector<2x4xf32>
    %29 = arith.mulf %7, %28 : vector<2x4xf32>
    %cst_12 = arith.constant dense<0.000000e+00> : vector<2xf32>
    %30 = vector.multi_reduction <add>, %29, %cst_12 [1] : vector<2x4xf32> to vector<2xf32>
    %31 = vector.shape_cast %30 : vector<2xf32> to vector<2x1xf32>
    %32 = vector.broadcast %11 : vector<1x1xf32> to vector<2x1xf32>
    %33 = arith.addf %31, %32 : vector<2x1xf32>
    %34 = vector.extract_strided_slice %27 {offsets = [0, 0], sizes = [2, 1], strides = [1, 1]} : vector<4x1xf32> to vector<2x1xf32>
    %35 = arith.addf %34, %33 : vector<2x1xf32>
    %36 = vector.extract_strided_slice %27 {offsets = [2, 0], sizes = [2, 1], strides = [1, 1]} : vector<4x1xf32> to vector<2x1xf32>
    %37 = arith.addf %36, %33 : vector<2x1xf32>
    %38 = vector.broadcast %35 : vector<2x1xf32> to vector<2x32xf32>
    %39 = vector.broadcast %13 : vector<1x32xf32> to vector<2x32xf32>
    %40 = arith.mulf %38, %39 : vector<2x32xf32>
    %41 = vector.broadcast %37 : vector<2x1xf32> to vector<2x32xf32>
    %42 = vector.broadcast %14 : vector<1x32xf32> to vector<2x32xf32>
    %43 = arith.mulf %41, %42 : vector<2x32xf32>
    %44 = arith.addf %40, %43 : vector<2x32xf32>
    %45 = vector.broadcast %15 : vector<1x32xf32> to vector<2x32xf32>
    %46 = arith.addf %44, %45 : vector<2x32xf32>
    %cst_13 = arith.constant 0.000000e+00 : f32
    %47 = vector.broadcast %cst_13 : f32 to vector<2x32xf32>
    %48 = arith.maximumf %46, %47 : vector<2x32xf32>
    %49 = vector.broadcast %16 : vector<1x32xf32> to vector<2x32xf32>
    %50 = arith.mulf %48, %49 : vector<2x32xf32>
    %cst_14 = arith.constant dense<0.000000e+00> : vector<2xf32>
    %51 = vector.multi_reduction <add>, %50, %cst_14 [1] : vector<2x32xf32> to vector<2xf32>
    %52 = vector.shape_cast %51 : vector<2xf32> to vector<2x1xf32>
    %53 = vector.broadcast %12 : vector<1x1xf32> to vector<2x1xf32>
    %54 = arith.addf %52, %53 : vector<2x1xf32>
    %55 = vector.shape_cast %54 : vector<2x1xf32> to vector<2x1xf32>
    %56 = vector.broadcast %55 : vector<2x1xf32> to vector<2x128xf32>
    %c0_15 = arith.constant 0 : index
    %c0_16 = arith.constant 0 : index
    %c0_17 = arith.constant 0 : index
    %57 = vector.load %arg6[%c0_15, %c0_16, %c0_17] : memref<1x2x128xf32, #tpu.memory_space<vmem>>, vector<1x2x128xf32>
    %58 = vector.shape_cast %57 : vector<1x2x128xf32> to vector<2x128xf32>
    %59 = vector.shape_cast %56 : vector<2x128xf32> to vector<1x2x128xf32>
    tpu.vector_store %arg6[%c0_15, %c0_16, %c0_17], %59 {strides = array<i32>} : memref<1x2x128xf32, #tpu.memory_space<vmem>>, vector<1x2x128xf32>,
    return
  }
  func.func @transform_0(%arg0: i32) -> (i32, i32, i32) {
    %c0_i32 = arith.constant 0 : i32
    %c0_i32_0 = arith.constant 0 : i32
    %c0_i32_1 = arith.constant 0 : i32
    return %arg0, %c0_i32, %c0_i32_0 : i32, i32, i32
  }
  func.func @transform_1(%arg0: i32) -> (i32, i32) {
    %c0_i32 = arith.constant 0 : i32
    %c0_i32_0 = arith.constant 0 : i32
    %c0_i32_1 = arith.constant 0 : i32
    return %c0_i32, %c0_i32_0 : i32, i32
  }
  func.func @transform_2(%arg0: i32) -> (i32, i32) {
    %c0_i32 = arith.constant 0 : i32
    %c0_i32_0 = arith.constant 0 : i32
    %c0_i32_1 = arith.constant 0 : i32
    return %c0_i32, %c0_i32_0 : i32, i32
  }
  func.func @transform_3(%arg0: i32) -> (i32, i32) {
    %c0_i32 = arith.constant 0 : i32
    %c0_i32_0 = arith.constant 0 : i32
    %c0_i32_1 = arith.constant 0 : i32
    return %c0_i32, %c0_i32_0 : i32, i32
  }
  func.func @transform_4(%arg0: i32) -> (i32, i32) {
    %c0_i32 = arith.constant 0 : i32
    %c0_i32_0 = arith.constant 0 : i32
    %c0_i32_1 = arith.constant 0 : i32
    return %c0_i32, %c0_i32_0 : i32, i32
  }
  func.func @transform_5(%arg0: i32) -> (i32, i32, i32) {
    %c0_i32 = arith.constant 0 : i32
    %c0_i32_0 = arith.constant 0 : i32
    %c0_i32_1 = arith.constant 0 : i32
    return %arg0, %c0_i32, %c0_i32_0 : i32, i32, i32
  }
}

</mosaic_0001>

<llo_original>
// kernel: diff_from_level_forward.1
$region0: #{diff_from_level_forward.1}
  #allocation0 [shape = 'u32[]', space=smem, size = 0x4, offset = 0x4, fixed_abs, tag = 'smem constant byte address 0x4 - core index']
  #allocation1 [shape = 'u32[144,128]{1,0:T(1,128)}', space=vmem, size = 0x12000, scoped, tag = 'internal scratch']
  %s0 = inlined_call_operand.vmem [shape: f32[1,1024,36], index: 0, kind: input, shape index: {}]
  %s1 = inlined_call_operand.vmem [shape: f32[2,4], index: 1, kind: input, shape index: {}]
  %s2 = inlined_call_operand.vmem [shape: f32[4,1024], index: 2, kind: input, shape index: {}]
  %s3 = inlined_call_operand.vmem [shape: f32[36,8], index: 3, kind: input, shape index: {}]
  %s4 = inlined_call_operand.vmem [shape: f32[8,128], index: 4, kind: input, shape index: {}]
  %s5 = inlined_call_operand.vmem [shape: f32[1,2,128], index: 5, kind: output, shape index: {}]
  %s6 = sld [smem:[#allocation0]]
  $region30: #{diff_from_level_forward.1} parent=0
    _
  %s8 = ssub.s32 1, %s6
  %s9 = scalar_select 0, %s8, %s6
  // Predicated region
  $region2: #{diff_from_level_forward.1} parent=0 // pred_check
    _
  $region3: #{diff_from_level_forward.1} parent=0 // pred_check_branch
    %11 = sbr.rel (0) target = $region5
  $region4: #{diff_from_level_forward.1} parent=0 // pred_region
    _
  $region5: #{diff_from_level_forward.1} parent=0 // pred_fallthru
    _
  // Predicated region
  $region6: #{diff_from_level_forward.1} parent=0 // pred_check
    _
  $region7: #{diff_from_level_forward.1} parent=0 // pred_check_branch
    %13 = sbr.rel (0) target = $region9
  $region8: #{diff_from_level_forward.1} parent=0 // pred_region
    _
  $region9: #{diff_from_level_forward.1} parent=0 // pred_fallthru
    _
  // Predicated region
  $region10: #{diff_from_level_forward.1} parent=0 // pred_check
    _
  $region11: #{diff_from_level_forward.1} parent=0 // pred_check_branch
    %15 = sbr.rel (0) target = $region13
  $region12: #{diff_from_level_forward.1} parent=0 // pred_region
    _
  $region13: #{diff_from_level_forward.1} parent=0 // pred_fallthru
    _
  // Predicated region
  $region14: #{diff_from_level_forward.1} parent=0 // pred_check
    _
  $region15: #{diff_from_level_forward.1} parent=0 // pred_check_branch
    %17 = sbr.rel (0) target = $region17
  $region16: #{diff_from_level_forward.1} parent=0 // pred_region
    _
  $region17: #{diff_from_level_forward.1} parent=0 // pred_fallthru
    _
  // Predicated region
  $region18: #{diff_from_level_forward.1} parent=0 // pred_check
    _
  $region19: #{diff_from_level_forward.1} parent=0 // pred_check_branch
    %19 = sbr.rel (0) target = $region21
  $region20: #{diff_from_level_forward.1} parent=0 // pred_region
    _
  $region21: #{diff_from_level_forward.1} parent=0 // pred_fallthru
    _
  %v20 = vld [vmem:[%s0] sm:$0xff]
  %v21 = vld [vmem:[%s0 + $0x8] sm:$0xff]
  %v22 = vld [vmem:[%s0 + $0x10] sm:$0xff]
  %v23 = vld [vmem:[%s0 + $0x18] sm:$0xff]
  %v24 = vld [vmem:[%s0 + $0x20] sm:$0xff]
  %v25 = vld [vmem:[%s0 + $0x28] sm:$0xff]
  %v26 = vld [vmem:[%s0 + $0x30] sm:$0xff]
  %v27 = vld [vmem:[%s0 + $0x38] sm:$0xff]
  %v28 = vld [vmem:[%s0 + $0x40] sm:$0xff]
  %v29 = vld [vmem:[%s0 + $0x48] sm:$0xff]
  %v30 = vld [vmem:[%s0 + $0x50] sm:$0xff]
  %v31 = vld [vmem:[%s0 + $0x58] sm:$0xff]
  %v32 = vld [vmem:[%s0 + $0x60] sm:$0xff]
  %v33 = vld [vmem:[%s0 + $0x68] sm:$0xff]
  %v34 = vld [vmem:[%s0 + $0x70] sm:$0xff]
  %v35 = vld [vmem:[%s0 + $0x78] sm:$0xff]
  %v36 = vld [vmem:[%s0 + $0x80] sm:$0xff]
  %v37 = vld [vmem:[%s0 + $0x88] sm:$0xff]
  %v38 = vld [vmem:[%s0 + $0x90] sm:$0xff]
  %v39 = vld [vmem:[%s0 + $0x98] sm:$0xff]
  %v40 = vld [vmem:[%s0 + $0xa0] sm:$0xff]
  %v41 = vld [vmem:[%s0 + $0xa8] sm:$0xff]
  %v42 = vld [vmem:[%s0 + $0xb0] sm:$0xff]
  %v43 = vld [vmem:[%s0 + $0xb8] sm:$0xff]
  %v44 = vld [vmem:[%s0 + $0xc0] sm:$0xff]
  %v45 = vld [vmem:[%s0 + $0xc8] sm:$0xff]
  %v46 = vld [vmem:[%s0 + $0xd0] sm:$0xff]
  %v47 = vld [vmem:[%s0 + $0xd8] sm:$0xff]
  %v48 = vld [vmem:[%s0 + $0xe0] sm:$0xff]
  %v49 = vld [vmem:[%s0 + $0xe8] sm:$0xff]
  %v50 = vld [vmem:[%s0 + $0xf0] sm:$0xff]
  %v51 = vld [vmem:[%s0 + $0xf8] sm:$0xff]
  %v52 = vld [vmem:[%s0 + $0x100] sm:$0xff]
  %v53 = vld [vmem:[%s0 + $0x108] sm:$0xff]
  %v54 = vld [vmem:[%s0 + $0x110] sm:$0xff]
  %v55 = vld [vmem:[%s0 + $0x118] sm:$0xff]
  %v56 = vld [vmem:[%s0 + $0x120] sm:$0xff]
  %v57 = vld [vmem:[%s0 + $0x128] sm:$0xff]
  %v58 = vld [vmem:[%s0 + $0x130] sm:$0xff]
  %v59 = vld [vmem:[%s0 + $0x138] sm:$0xff]
  %v60 = vld [vmem:[%s0 + $0x140] sm:$0xff]
  %v61 = vld [vmem:[%s0 + $0x148] sm:$0xff]
  %v62 = vld [vmem:[%s0 + $0x150] sm:$0xff]
  %v63 = vld [vmem:[%s0 + $0x158] sm:$0xff]
  %v64 = vld [vmem:[%s0 + $0x160] sm:$0xff]
  %v65 = vld [vmem:[%s0 + $0x168] sm:$0xff]
  %v66 = vld [vmem:[%s0 + $0x170] sm:$0xff]
  %v67 = vld [vmem:[%s0 + $0x178] sm:$0xff]
  %v68 = vld [vmem:[%s0 + $0x180] sm:$0xff]
  %v69 = vld [vmem:[%s0 + $0x188] sm:$0xff]
  %v70 = vld [vmem:[%s0 + $0x190] sm:$0xff]
  %v71 = vld [vmem:[%s0 + $0x198] sm:$0xff]
  %v72 = vld [vmem:[%s0 + $0x1a0] sm:$0xff]
  %v73 = vld [vmem:[%s0 + $0x1a8] sm:$0xff]
  %v74 = vld [vmem:[%s0 + $0x1b0] sm:$0xff]
  %v75 = vld [vmem:[%s0 + $0x1b8] sm:$0xff]
  %v76 = vld [vmem:[%s0 + $0x1c0] sm:$0xff]
  %v77 = vld [vmem:[%s0 + $0x1c8] sm:$0xff]
  %v78 = vld [vmem:[%s0 + $0x1d0] sm:$0xff]
  %v79 = vld [vmem:[%s0 + $0x1d8] sm:$0xff]
  %v80 = vld [vmem:[%s0 + $0x1e0] sm:$0xff]
  %v81 = vld [vmem:[%s0 + $0x1e8] sm:$0xff]
  %v82 = vld [vmem:[%s0 + $0x1f0] sm:$0xff]
  %v83 = vld [vmem:[%s0 + $0x1f8] sm:$0xff]
  %v84 = vld [vmem:[%s0 + $0x200] sm:$0xff]
  %v85 = vld [vmem:[%s0 + $0x208] sm:$0xff]
  %v86 = vld [vmem:[%s0 + $0x210] sm:$0xff]
  %v87 = vld [vmem:[%s0 + $0x218] sm:$0xff]
  %v88 = vld [vmem:[%s0 + $0x220] sm:$0xff]
  %v89 = vld [vmem:[%s0 + $0x228] sm:$0xff]
  %v90 = vld [vmem:[%s0 + $0x230] sm:$0xff]
  %v91 = vld [vmem:[%s0 + $0x238] sm:$0xff]
  %v92 = vld [vmem:[%s0 + $0x240] sm:$0xff]
  %v93 = vld [vmem:[%s0 + $0x248] sm:$0xff]
  %v94 = vld [vmem:[%s0 + $0x250] sm:$0xff]
  %v95 = vld [vmem:[%s0 + $0x258] sm:$0xff]
  %v96 = vld [vmem:[%s0 + $0x260] sm:$0xff]
  %v97 = vld [vmem:[%s0 + $0x268] sm:$0xff]
  %v98 = vld [vmem:[%s0 + $0x270] sm:$0xff]
  %v99 = vld [vmem:[%s0 + $0x278] sm:$0xff]
  %v100 = vld [vmem:[%s0 + $0x280] sm:$0xff]
  %v101 = vld [vmem:[%s0 + $0x288] sm:$0xff]
  %v102 = vld [vmem:[%s0 + $0x290] sm:$0xff]
  %v103 = vld [vmem:[%s0 + $0x298] sm:$0xff]
  %v104 = vld [vmem:[%s0 + $0x2a0] sm:$0xff]
  %v105 = vld [vmem:[%s0 + $0x2a8] sm:$0xff]
  %v106 = vld [vmem:[%s0 + $0x2b0] sm:$0xff]
  %v107 = vld [vmem:[%s0 + $0x2b8] sm:$0xff]
  %v108 = vld [vmem:[%s0 + $0x2c0] sm:$0xff]
  %v109 = vld [vmem:[%s0 + $0x2c8] sm:$0xff]
  %v110 = vld [vmem:[%s0 + $0x2d0] sm:$0xff]
  %v111 = vld [vmem:[%s0 + $0x2d8] sm:$0xff]
  %v112 = vld [vmem:[%s0 + $0x2e0] sm:$0xff]
  %v113 = vld [vmem:[%s0 + $0x2e8] sm:$0xff]
  %v114 = vld [vmem:[%s0 + $0x2f0] sm:$0xff]
  %v115 = vld [vmem:[%s0 + $0x2f8] sm:$0xff]
  %v116 = vld [vmem:[%s0 + $0x300] sm:$0xff]
  %v117 = vld [vmem:[%s0 + $0x308] sm:$0xff]
  %v118 = vld [vmem:[%s0 + $0x310] sm:$0xff]
  %v119 = vld [vmem:[%s0 + $0x318] sm:$0xff]
  %v120 = vld [vmem:[%s0 + $0x320] sm:$0xff]
  %v121 = vld [vmem:[%s0 + $0x328] sm:$0xff]
  %v122 = vld [vmem:[%s0 + $0x330] sm:$0xff]
  %v123 = vld [vmem:[%s0 + $0x338] sm:$0xff]
  %v124 = vld [vmem:[%s0 + $0x340] sm:$0xff]
  %v125 = vld [vmem:[%s0 + $0x348] sm:$0xff]
  %v126 = vld [vmem:[%s0 + $0x350] sm:$0xff]
  %v127 = vld [vmem:[%s0 + $0x358] sm:$0xff]
  %v128 = vld [vmem:[%s0 + $0x360] sm:$0xff]
  %v129 = vld [vmem:[%s0 + $0x368] sm:$0xff]
  %v130 = vld [vmem:[%s0 + $0x370] sm:$0xff]
  %v131 = vld [vmem:[%s0 + $0x378] sm:$0xff]
  %v132 = vld [vmem:[%s0 + $0x380] sm:$0xff]
  %v133 = vld [vmem:[%s0 + $0x388] sm:$0xff]
  %v134 = vld [vmem:[%s0 + $0x390] sm:$0xff]
  %v135 = vld [vmem:[%s0 + $0x398] sm:$0xff]
  %v136 = vld [vmem:[%s0 + $0x3a0] sm:$0xff]
  %v137 = vld [vmem:[%s0 + $0x3a8] sm:$0xff]
  %v138 = vld [vmem:[%s0 + $0x3b0] sm:$0xff]
  %v139 = vld [vmem:[%s0 + $0x3b8] sm:$0xff]
  %v140 = vld [vmem:[%s0 + $0x3c0] sm:$0xff]
  %v141 = vld [vmem:[%s0 + $0x3c8] sm:$0xff]
  %v142 = vld [vmem:[%s0 + $0x3d0] sm:$0xff]
  %v143 = vld [vmem:[%s0 + $0x3d8] sm:$0xff]
  %v144 = vld [vmem:[%s0 + $0x3e0] sm:$0xff]
  %v145 = vld [vmem:[%s0 + $0x3e8] sm:$0xff]
  %v146 = vld [vmem:[%s0 + $0x3f0] sm:$0xff]
  %v147 = vld [vmem:[%s0 + $0x3f8] sm:$0xff]
  %v148 = vld [vmem:[%s3] sm:$0xff]
  %v149 = vld [vmem:[%s3 + $0x8] sm:$0xff]
  %v150 = vld [vmem:[%s3 + $0x10] sm:$0xff]
  %v151 = vld [vmem:[%s3 + $0x18] sm:$0xff]
  %v152 = vld [vmem:[%s3 + $0x20] sm:$0xf]
  %v153 = vld [vmem:[%s4] sm:$0xff]
  %s154 = smul.u32 0, 2
  %s155 = scalar_lea.vmem %s1, %s154
  %v156 = vld [vmem:[%s155] sm:$0x3]
  %v157 = vlaneseq
  %v158 = vshrl.u32 %v157, 7
  %v159 = vsub.s32 0, %v158
  %v160 = vrot.slane %v153, %v159
  %vm161 = vcmask 293888
  %v163 = vsel %vm161, %v20, 0
  %v166 = vsel %vm161, %v21, 0
  %v169 = vsel %vm161, %v22, 0
  %v172 = vsel %vm161, %v23, 0
  %v175 = vsel %vm161, %v24, 0
  %v178 = vsel %vm161, %v25, 0
  %v181 = vsel %vm161, %v26, 0
  %v184 = vsel %vm161, %v27, 0
  %v187 = vsel %vm161, %v28, 0
  %v190 = vsel %vm161, %v29, 0
  %v193 = vsel %vm161, %v30, 0
  %v196 = vsel %vm161, %v31, 0
  %v199 = vsel %vm161, %v32, 0
  %v202 = vsel %vm161, %v33, 0
  %v205 = vsel %vm161, %v34, 0
  %v208 = vsel %vm161, %v35, 0
  %v211 = vsel %vm161, %v36, 0
  %v214 = vsel %vm161, %v37, 0
  %v217 = vsel %vm161, %v38, 0
  %v220 = vsel %vm161, %v39, 0
  %v223 = vsel %vm161, %v40, 0
  %v226 = vsel %vm161, %v41, 0
  %v229 = vsel %vm161, %v42, 0
  %v232 = vsel %vm161, %v43, 0
  %v235 = vsel %vm161, %v44, 0
  %v238 = vsel %vm161, %v45, 0
  %v241 = vsel %vm161, %v46, 0
  %v244 = vsel %vm161, %v47, 0
  %v247 = vsel %vm161, %v48, 0
  %v250 = vsel %vm161, %v49, 0
  %v253 = vsel %vm161, %v50, 0
  %v256 = vsel %vm161, %v51, 0
  %v259 = vsel %vm161, %v52, 0
  %v262 = vsel %vm161, %v53, 0
  %v265 = vsel %vm161, %v54, 0
  %v268 = vsel %vm161, %v55, 0
  %v271 = vsel %vm161, %v56, 0
  %v274 = vsel %vm161, %v57, 0
  %v277 = vsel %vm161, %v58, 0
  %v280 = vsel %vm161, %v59, 0
  %v283 = vsel %vm161, %v60, 0
  %v286 = vsel %vm161, %v61, 0
  %v289 = vsel %vm161, %v62, 0
  %v292 = vsel %vm161, %v63, 0
  %v295 = vsel %vm161, %v64, 0
  %v298 = vsel %vm161, %v65, 0
  %v301 = vsel %vm161, %v66, 0
  %v304 = vsel %vm161, %v67, 0
  %v307 = vsel %vm161, %v68, 0
  %v310 = vsel %vm161, %v69, 0
  %v313 = vsel %vm161, %v70, 0
  %v316 = vsel %vm161, %v71, 0
  %v319 = vsel %vm161, %v72, 0
  %v322 = vsel %vm161, %v73, 0
  %v325 = vsel %vm161, %v74, 0
  %v328 = vsel %vm161, %v75, 0
  %v331 = vsel %vm161, %v76, 0
  %v334 = vsel %vm161, %v77, 0
  %v337 = vsel %vm161, %v78, 0
  %v340 = vsel %vm161, %v79, 0
  %v343 = vsel %vm161, %v80, 0
  %v346 = vsel %vm161, %v81, 0
  %v349 = vsel %vm161, %v82, 0
  %v352 = vsel %vm161, %v83, 0
  %v355 = vsel %vm161, %v84, 0
  %v358 = vsel %vm161, %v85, 0
  %v361 = vsel %vm161, %v86, 0
  %v364 = vsel %vm161, %v87, 0
  %v367 = vsel %vm161, %v88, 0
  %v370 = vsel %vm161, %v89, 0
  %v373 = vsel %vm161, %v90, 0
  %v376 = vsel %vm161, %v91, 0
  %v379 = vsel %vm161, %v92, 0
  %v382 = vsel %vm161, %v93, 0
  %v385 = vsel %vm161, %v94, 0
  %v388 = vsel %vm161, %v95, 0
  %v391 = vsel %vm161, %v96, 0
  %v394 = vsel %vm161, %v97, 0
  %v397 = vsel %vm161, %v98, 0
  %v400 = vsel %vm161, %v99, 0
  %v403 = vsel %vm161, %v100, 0
  %v406 = vsel %vm161, %v101, 0
  %v409 = vsel %vm161, %v102, 0
  %v412 = vsel %vm161, %v103, 0
  %v415 = vsel %vm161, %v104, 0
  %v418 = vsel %vm161, %v105, 0
  %v421 = vsel %vm161, %v106, 0
  %v424 = vsel %vm161, %v107, 0
  %v427 = vsel %vm161, %v108, 0
  %v430 = vsel %vm161, %v109, 0
  %v433 = vsel %vm161, %v110, 0
  %v436 = vsel %vm161, %v111, 0
  %v439 = vsel %vm161, %v112, 0
  %v442 = vsel %vm161, %v113, 0
  %v445 = vsel %vm161, %v114, 0
  %v448 = vsel %vm161, %v115, 0
  %v451 = vsel %vm161, %v116, 0
  %v454 = vsel %vm161, %v117, 0
  %v457 = vsel %vm161, %v118, 0
  %v460 = vsel %vm161, %v119, 0
  %v463 = vsel %vm161, %v120, 0
  %v466 = vsel %vm161, %v121, 0
  %v469 = vsel %vm161, %v122, 0
  %v472 = vsel %vm161, %v123, 0
  %v475 = vsel %vm161, %v124, 0
  %v478 = vsel %vm161, %v125, 0
  %v481 = vsel %vm161, %v126, 0
  %v484 = vsel %vm161, %v127, 0
  %v487 = vsel %vm161, %v128, 0
  %v490 = vsel %vm161, %v129, 0
  %v493 = vsel %vm161, %v130, 0
  %v496 = vsel %vm161, %v131, 0
  %v499 = vsel %vm161, %v132, 0
  %v502 = vsel %vm161, %v133, 0
  %v505 = vsel %vm161, %v134, 0
  %v508 = vsel %vm161, %v135, 0
  %v511 = vsel %vm161, %v136, 0
  %v514 = vsel %vm161, %v137, 0
  %v517 = vsel %vm161, %v138, 0
  %v520 = vsel %vm161, %v139, 0
  %v523 = vsel %vm161, %v140, 0
  %v526 = vsel %vm161, %v141, 0
  %v529 = vsel %vm161, %v142, 0
  %v532 = vsel %vm161, %v143, 0
  %v535 = vsel %vm161, %v144, 0
  %v538 = vsel %vm161, %v145, 0
  %v541 = vsel %vm161, %v146, 0
  %v544 = vsel %vm161, %v147, 0
  %vm546 = vcmask 1043456
  %v548 = vsel %vm546, %v152, 0
  %550 = vmatprep.subr.mxu0 0.0
  %551 = vmatpush1.msra.mxu0 %v148
  %552 = vmatprep.subr.mxu0 0.0
  %553 = vmatpush1.msra.mxu0 %v149
  %554 = vmatprep.subr.mxu0 0.0
  %555 = vmatpush1.msra.mxu0 %v150
  %556 = vmatprep.subr.mxu0 0.0
  %557 = vmatpush1.msra.mxu0 %v151
  %558 = vmatprep.subr.mxu0 0.0
  %559 = vmatpush1.msra.mxu0 %v548
  %560 = vmatprep.subr.mxu0 0.0
  %561 = vmatpush1.msra.mxu0 0.0
  %562 = vmatprep.subr.mxu0 0.0
  %563 = vmatpush1.msra.mxu0 0.0
  %564 = vmatprep.subr.mxu0 0.0
  %565 = vmatpush1.msra.mxu0 0.0
  %566 = vmatprep.subr.mxu0 0.0
  %567 = vmatpush1.msra.mxu0 0.0
  %568 = vmatprep.subr.mxu0 0.0
  %569 = vmatpush1.msra.mxu0 0.0
  %570 = vmatprep.subr.mxu0 0.0
  %571 = vmatpush1.msra.mxu0 0.0
  %572 = vmatprep.subr.mxu0 0.0
  %573 = vmatpush1.msra.mxu0 0.0
  %574 = vmatprep.subr.mxu0 0.0
  %575 = vmatpush1.msra.mxu0 0.0
  %576 = vmatprep.subr.mxu0 0.0
  %577 = vmatpush1.msra.mxu0 0.0
  %578 = vmatprep.subr.mxu0 0.0
  %579 = vmatpush1.msra.mxu0 0.0
  %580 = vmatprep.subr.mxu0 0.0
  %581 = vmatpush1.msra.mxu0 0.0
  %582 = vmatprep.subr.mxu0 0.0
  %583 = vmatpush1.msra.mxu0 0.0
  %584 = vmatprep.subr.mxu0 0.0
  %585 = vmatpush1.msra.mxu0 0.0
  %586 = vmatprep.subr.mxu0 0.0
  %587 = vmatpush1.msra.mxu0 0.0
  %588 = vmatprep.subr.mxu0 0.0
  %589 = vmatpush1.msra.mxu0 0.0
  %590 = vmatprep.subr.mxu0 0.0
  %591 = vmatpush1.msra.mxu0 0.0
  %592 = vmatprep.subr.mxu0 0.0
  %593 = vmatpush1.msra.mxu0 0.0
  %594 = vmatprep.subr.mxu0 0.0
  %595 = vmatpush1.msra.mxu0 0.0
  %596 = vmatprep.subr.mxu0 0.0
  %597 = vmatpush1.msra.mxu0 0.0
  %598 = vmatprep.subr.mxu0 0.0
  %599 = vmatpush1.msra.mxu0 0.0
  %600 = vmatprep.subr.mxu0 0.0
  %601 = vmatpush1.msra.mxu0 0.0
  %602 = vmatprep.subr.mxu0 0.0
  %603 = vmatpush1.msra.mxu0 0.0
  %604 = vmatprep.subr.mxu0 0.0
  %605 = vmatpush1.msra.mxu0 0.0
  %606 = vmatprep.subr.mxu0 0.0
  %607 = vmatpush1.msra.mxu0 0.0
  %608 = vmatprep.subr.mxu0 0.0
  %609 = vmatpush1.msra.mxu0 0.0
  %610 = vmatprep.subr.mxu0 0.0
  %611 = vmatpush1.msra.mxu0 0.0
  %612 = vmatprep.subr.mxu0 0.0
  %613 = vmatpush1.msra.mxu0 0.0
  %614 = vmatprep.mubr.f32.mxu0 0.0
  %615 = vmatmul.mubr.f32.gmra.mrb[0].mxu0 %v163
  %v616 = vpop.f32.mrb[0].mxu0
  %v617 = vadd.f32 %v160, %v616
  %v618 = vpop.f32.mrb[0].mxu0
  %619 = vmatprep.mubr.f32.mxu0 0.0
  %620 = vmatmul.mubr.f32.gmra.mrb[0].mxu0 %v166
  %v621 = vpop.f32.mrb[0].mxu0
  %v622 = vadd.f32 %v160, %v621
  %v623 = vpop.f32.mrb[0].mxu0
  %624 = vmatprep.mubr.f32.mxu0 0.0
  %625 = vmatmul.mubr.f32.gmra.mrb[0].mxu0 %v169
  %v626 = vpop.f32.mrb[0].mxu0
  %v627 = vadd.f32 %v160, %v626
  %v628 = vpop.f32.mrb[0].mxu0
  %629 = vmatprep.mubr.f32.mxu0 0.0
  %630 = vmatmul.mubr.f32.gmra.mrb[0].mxu0 %v172
  %v631 = vpop.f32.mrb[0].mxu0
  %v632 = vadd.f32 %v160, %v631
  %v633 = vpop.f32.mrb[0].mxu0
  %634 = vmatprep.mubr.f32.mxu0 0.0
  %635 = vmatmul.mubr.f32.gmra.mrb[0].mxu0 %v175
  %v636 = vpop.f32.mrb[0].mxu0
  %v637 = vadd.f32 %v160, %v636
  %v638 = vpop.f32.mrb[0].mxu0
  %639 = vmatprep.mubr.f32.mxu0 0.0
  %640 = vmatmul.mubr.f32.gmra.mrb[0].mxu0 %v178
  %v641 = vpop.f32.mrb[0].mxu0
  %v642 = vadd.f32 %v160, %v641
  %v643 = vpop.f32.mrb[0].mxu0
  %644 = vmatprep.mubr.f32.mxu0 0.0
  %645 = vmatmul.mubr.f32.gmra.mrb[0].mxu0 %v181
  %v646 = vpop.f32.mrb[0].mxu0
  %v647 = vadd.f32 %v160, %v646
  %v648 = vpop.f32.mrb[0].mxu0
  %649 = vmatprep.mubr.f32.mxu0 0.0
  %650 = vmatmul.mubr.f32.gmra.mrb[0].mxu0 %v184
  %v651 = vpop.f32.mrb[0].mxu0
  %v652 = vadd.f32 %v160, %v651
  %v653 = vpop.f32.mrb[0].mxu0
  %654 = vmatprep.mubr.f32.mxu0 0.0
  %655 = vmatmul.mubr.f32.gmra.mrb[0].mxu0 %v187
  %v656 = vpop.f32.mrb[0].mxu0
  %v657 = vadd.f32 %v160, %v656
  %v658 = vpop.f32.mrb[0].mxu0
  %659 = vmatprep.mubr.f32.mxu0 0.0
  %660 = vmatmul.mubr.f32.gmra.mrb[0].mxu0 %v190
  %v661 = vpop.f32.mrb[0].mxu0
  %v662 = vadd.f32 %v160, %v661
  %v663 = vpop.f32.mrb[0].mxu0
  %664 = vmatprep.mubr.f32.mxu0 0.0
  %665 = vmatmul.mubr.f32.gmra.mrb[0].mxu0 %v193
  %v666 = vpop.f32.mrb[0].mxu0
  %v667 = vadd.f32 %v160, %v666
  %v668 = vpop.f32.mrb[0].mxu0
  %669 = vmatprep.mubr.f32.mxu0 0.0
  %670 = vmatmul.mubr.f32.gmra.mrb[0].mxu0 %v196
  %v671 = vpop.f32.mrb[0].mxu0
  %v672 = vadd.f32 %v160, %v671
  %v673 = vpop.f32.mrb[0].mxu0
  %674 = vmatprep.mubr.f32.mxu0 0.0
  %675 = vmatmul.mubr.f32.gmra.mrb[0].mxu0 %v199
  %v676 = vpop.f32.mrb[0].mxu0
  %v677 = vadd.f32 %v160, %v676
  %v678 = vpop.f32.mrb[0].mxu0
  %679 = vmatprep.mubr.f32.mxu0 0.0
  %680 = vmatmul.mubr.f32.gmra.mrb[0].mxu0 %v202
  %v681 = vpop.f32.mrb[0].mxu0
  %v682 = vadd.f32 %v160, %v681
  %v683 = vpop.f32.mrb[0].mxu0
  %684 = vmatprep.mubr.f32.mxu0 0.0
  %685 = vmatmul.mubr.f32.gmra.mrb[0].mxu0 %v205
  %v686 = vpop.f32.mrb[0].mxu0
  %v687 = vadd.f32 %v160, %v686
  %v688 = vpop.f32.mrb[0].mxu0
  %689 = vmatprep.mubr.f32.mxu0 0.0
  %690 = vmatmul.mubr.f32.gmra.mrb[0].mxu0 %v208
  %v691 = vpop.f32.mrb[0].mxu0
  %v692 = vadd.f32 %v160, %v691
  %v693 = vpop.f32.mrb[0].mxu0
  %694 = vmatprep.mubr.f32.mxu0 0.0
  %695 = vmatmul.mubr.f32.gmra.mrb[0].mxu0 %v211
  %v696 = vpop.f32.mrb[0].mxu0
  %v697 = vadd.f32 %v160, %v696
  %v698 = vpop.f32.mrb[0].mxu0
  %699 = vmatprep.mubr.f32.mxu0 0.0
  %700 = vmatmul.mubr.f32.gmra.mrb[0].mxu0 %v214
  %v701 = vpop.f32.mrb[0].mxu0
  %v702 = vadd.f32 %v160, %v701
  %v703 = vpop.f32.mrb[0].mxu0
  %704 = vmatprep.mubr.f32.mxu0 0.0
  %705 = vmatmul.mubr.f32.gmra.mrb[0].mxu0 %v217
  %v706 = vpop.f32.mrb[0].mxu0
  %v707 = vadd.f32 %v160, %v706
  %v708 = vpop.f32.mrb[0].mxu0
  %709 = vmatprep.mubr.f32.mxu0 0.0
  %710 = vmatmul.mubr.f32.gmra.mrb[0].mxu0 %v220
  %v711 = vpop.f32.mrb[0].mxu0
  %v712 = vadd.f32 %v160, %v711
  %v713 = vpop.f32.mrb[0].mxu0
  %714 = vmatprep.mubr.f32.mxu0 0.0
  %715 = vmatmul.mubr.f32.gmra.mrb[0].mxu0 %v223
  %v716 = vpop.f32.mrb[0].mxu0
  %v717 = vadd.f32 %v160, %v716
  %v718 = vpop.f32.mrb[0].mxu0
  %719 = vmatprep.mubr.f32.mxu0 0.0
  %720 = vmatmul.mubr.f32.gmra.mrb[0].mxu0 %v226
  %v721 = vpop.f32.mrb[0].mxu0
  %v722 = vadd.f32 %v160, %v721
  %v723 = vpop.f32.mrb[0].mxu0
  %724 = vmatprep.mubr.f32.mxu0 0.0
  %725 = vmatmul.mubr.f32.gmra.mrb[0].mxu0 %v229
  %v726 = vpop.f32.mrb[0].mxu0
  %v727 = vadd.f32 %v160, %v726
  %v728 = vpop.f32.mrb[0].mxu0
  %729 = vmatprep.mubr.f32.mxu0 0.0
  %730 = vmatmul.mubr.f32.gmra.mrb[0].mxu0 %v232
  %v731 = vpop.f32.mrb[0].mxu0
  %v732 = vadd.f32 %v160, %v731
  %v733 = vpop.f32.mrb[0].mxu0
  %734 = vmatprep.mubr.f32.mxu0 0.0
  %735 = vmatmul.mubr.f32.gmra.mrb[0].mxu0 %v235
  %v736 = vpop.f32.mrb[0].mxu0
  %v737 = vadd.f32 %v160, %v736
  %v738 = vpop.f32.mrb[0].mxu0
  %739 = vmatprep.mubr.f32.mxu0 0.0
  %740 = vmatmul.mubr.f32.gmra.mrb[0].mxu0 %v238
  %v741 = vpop.f32.mrb[0].mxu0
  %v742 = vadd.f32 %v160, %v741
  %v743 = vpop.f32.mrb[0].mxu0
  %744 = vmatprep.mubr.f32.mxu0 0.0
  %745 = vmatmul.mubr.f32.gmra.mrb[0].mxu0 %v241
  %v746 = vpop.f32.mrb[0].mxu0
  %v747 = vadd.f32 %v160, %v746
  %v748 = vpop.f32.mrb[0].mxu0
  %749 = vmatprep.mubr.f32.mxu0 0.0
  %750 = vmatmul.mubr.f32.gmra.mrb[0].mxu0 %v244
  %v751 = vpop.f32.mrb[0].mxu0
  %v752 = vadd.f32 %v160, %v751
  %v753 = vpop.f32.mrb[0].mxu0
  %754 = vmatprep.mubr.f32.mxu0 0.0
  %755 = vmatmul.mubr.f32.gmra.mrb[0].mxu0 %v247
  %v756 = vpop.f32.mrb[0].mxu0
  %v757 = vadd.f32 %v160, %v756
  %v758 = vpop.f32.mrb[0].mxu0
  %759 = vmatprep.mubr.f32.mxu0 0.0
  %760 = vmatmul.mubr.f32.gmra.mrb[0].mxu0 %v250
  %v761 = vpop.f32.mrb[0].mxu0
  %v762 = vadd.f32 %v160, %v761
  %v763 = vpop.f32.mrb[0].mxu0
  %764 = vmatprep.mubr.f32.mxu0 0.0
  %765 = vmatmul.mubr.f32.gmra.mrb[0].mxu0 %v253
  %v766 = vpop.f32.mrb[0].mxu0
  %v767 = vadd.f32 %v160, %v766
  %v768 = vpop.f32.mrb[0].mxu0
  %769 = vmatprep.mubr.f32.mxu0 0.0
  %770 = vmatmul.mubr.f32.gmra.mrb[0].mxu0 %v256
  %v771 = vpop.f32.mrb[0].mxu0
  %v772 = vadd.f32 %v160, %v771
  %v773 = vpop.f32.mrb[0].mxu0
  %774 = vmatprep.mubr.f32.mxu0 0.0
  %775 = vmatmul.mubr.f32.gmra.mrb[0].mxu0 %v259
  %v776 = vpop.f32.mrb[0].mxu0
  %v777 = vadd.f32 %v160, %v776
  %v778 = vpop.f32.mrb[0].mxu0
  %779 = vmatprep.mubr.f32.mxu0 0.0
  %780 = vmatmul.mubr.f32.gmra.mrb[0].mxu0 %v262
  %v781 = vpop.f32.mrb[0].mxu0
  %v782 = vadd.f32 %v160, %v781
  %v783 = vpop.f32.mrb[0].mxu0
  %784 = vmatprep.mubr.f32.mxu0 0.0
  %785 = vmatmul.mubr.f32.gmra.mrb[0].mxu0 %v265
  %v786 = vpop.f32.mrb[0].mxu0
  %v787 = vadd.f32 %v160, %v786
  %v788 = vpop.f32.mrb[0].mxu0
  %789 = vmatprep.mubr.f32.mxu0 0.0
  %790 = vmatmul.mubr.f32.gmra.mrb[0].mxu0 %v268
  %v791 = vpop.f32.mrb[0].mxu0
  %v792 = vadd.f32 %v160, %v791
  %v793 = vpop.f32.mrb[0].mxu0
  %794 = vmatprep.mubr.f32.mxu0 0.0
  %795 = vmatmul.mubr.f32.gmra.mrb[0].mxu0 %v271
  %v796 = vpop.f32.mrb[0].mxu0
  %v797 = vadd.f32 %v160, %v796
  %v798 = vpop.f32.mrb[0].mxu0
  %799 = vmatprep.mubr.f32.mxu0 0.0
  %800 = vmatmul.mubr.f32.gmra.mrb[0].mxu0 %v274
  %v801 = vpop.f32.mrb[0].mxu0
  %v802 = vadd.f32 %v160, %v801
  %v803 = vpop.f32.mrb[0].mxu0
  %804 = vmatprep.mubr.f32.mxu0 0.0
  %805 = vmatmul.mubr.f32.gmra.mrb[0].mxu0 %v277
  %v806 = vpop.f32.mrb[0].mxu0
  %v807 = vadd.f32 %v160, %v806
  %v808 = vpop.f32.mrb[0].mxu0
  %809 = vmatprep.mubr.f32.mxu0 0.0
  %810 = vmatmul.mubr.f32.gmra.mrb[0].mxu0 %v280
  %v811 = vpop.f32.mrb[0].mxu0
  %v812 = vadd.f32 %v160, %v811
  %v813 = vpop.f32.mrb[0].mxu0
  %814 = vmatprep.mubr.f32.mxu0 0.0
  %815 = vmatmul.mubr.f32.gmra.mrb[0].mxu0 %v283
  %v816 = vpop.f32.mrb[0].mxu0
  %v817 = vadd.f32 %v160, %v816
  %v818 = vpop.f32.mrb[0].mxu0
  %819 = vmatprep.mubr.f32.mxu0 0.0
  %820 = vmatmul.mubr.f32.gmra.mrb[0].mxu0 %v286
  %v821 = vpop.f32.mrb[0].mxu0
  %v822 = vadd.f32 %v160, %v821
  %v823 = vpop.f32.mrb[0].mxu0
  %824 = vmatprep.mubr.f32.mxu0 0.0
  %825 = vmatmul.mubr.f32.gmra.mrb[0].mxu0 %v289
  %v826 = vpop.f32.mrb[0].mxu0
  %v827 = vadd.f32 %v160, %v826
  %v828 = vpop.f32.mrb[0].mxu0
  %829 = vmatprep.mubr.f32.mxu0 0.0
  %830 = vmatmul.mubr.f32.gmra.mrb[0].mxu0 %v292
  %v831 = vpop.f32.mrb[0].mxu0
  %v832 = vadd.f32 %v160, %v831
  %v833 = vpop.f32.mrb[0].mxu0
  %834 = vmatprep.mubr.f32.mxu0 0.0
  %835 = vmatmul.mubr.f32.gmra.mrb[0].mxu0 %v295
  %v836 = vpop.f32.mrb[0].mxu0
  %v837 = vadd.f32 %v160, %v836
  %v838 = vpop.f32.mrb[0].mxu0
  %839 = vmatprep.mubr.f32.mxu0 0.0
  %840 = vmatmul.mubr.f32.gmra.mrb[0].mxu0 %v298
  %v841 = vpop.f32.mrb[0].mxu0
  %v842 = vadd.f32 %v160, %v841
  %v843 = vpop.f32.mrb[0].mxu0
  %844 = vmatprep.mubr.f32.mxu0 0.0
  %845 = vmatmul.mubr.f32.gmra.mrb[0].mxu0 %v301
  %v846 = vpop.f32.mrb[0].mxu0
  %v847 = vadd.f32 %v160, %v846
  %v848 = vpop.f32.mrb[0].mxu0
  %849 = vmatprep.mubr.f32.mxu0 0.0
  %850 = vmatmul.mubr.f32.gmra.mrb[0].mxu0 %v304
  %v851 = vpop.f32.mrb[0].mxu0
  %v852 = vadd.f32 %v160, %v851
  %v853 = vpop.f32.mrb[0].mxu0
  %854 = vmatprep.mubr.f32.mxu0 0.0
  %855 = vmatmul.mubr.f32.gmra.mrb[0].mxu0 %v307
  %v856 = vpop.f32.mrb[0].mxu0
  %v857 = vadd.f32 %v160, %v856
  %v858 = vpop.f32.mrb[0].mxu0
  %859 = vmatprep.mubr.f32.mxu0 0.0
  %860 = vmatmul.mubr.f32.gmra.mrb[0].mxu0 %v310
  %v861 = vpop.f32.mrb[0].mxu0
  %v862 = vadd.f32 %v160, %v861
  %v863 = vpop.f32.mrb[0].mxu0
  %864 = vmatprep.mubr.f32.mxu0 0.0
  %865 = vmatmul.mubr.f32.gmra.mrb[0].mxu0 %v313
  %v866 = vpop.f32.mrb[0].mxu0
  %v867 = vadd.f32 %v160, %v866
  %v868 = vpop.f32.mrb[0].mxu0
  %869 = vmatprep.mubr.f32.mxu0 0.0
  %870 = vmatmul.mubr.f32.gmra.mrb[0].mxu0 %v316
  %v871 = vpop.f32.mrb[0].mxu0
  %v872 = vadd.f32 %v160, %v871
  %v873 = vpop.f32.mrb[0].mxu0
  %874 = vmatprep.mubr.f32.mxu0 0.0
  %875 = vmatmul.mubr.f32.gmra.mrb[0].mxu0 %v319
  %v876 = vpop.f32.mrb[0].mxu0
  %v877 = vadd.f32 %v160, %v876
  %v878 = vpop.f32.mrb[0].mxu0
  %879 = vmatprep.mubr.f32.mxu0 0.0
  %880 = vmatmul.mubr.f32.gmra.mrb[0].mxu0 %v322
  %v881 = vpop.f32.mrb[0].mxu0
  %v882 = vadd.f32 %v160, %v881
  %v883 = vpop.f32.mrb[0].mxu0
  %884 = vmatprep.mubr.f32.mxu0 0.0
  %885 = vmatmul.mubr.f32.gmra.mrb[0].mxu0 %v325
  %v886 = vpop.f32.mrb[0].mxu0
  %v887 = vadd.f32 %v160, %v886
  %v888 = vpop.f32.mrb[0].mxu0
  %889 = vmatprep.mubr.f32.mxu0 0.0
  %890 = vmatmul.mubr.f32.gmra.mrb[0].mxu0 %v328
  %v891 = vpop.f32.mrb[0].mxu0
  %v892 = vadd.f32 %v160, %v891
  %v893 = vpop.f32.mrb[0].mxu0
  %894 = vmatprep.mubr.f32.mxu0 0.0
  %895 = vmatmul.mubr.f32.gmra.mrb[0].mxu0 %v331
  %v896 = vpop.f32.mrb[0].mxu0
  %v897 = vadd.f32 %v160, %v896
  %v898 = vpop.f32.mrb[0].mxu0
  %899 = vmatprep.mubr.f32.mxu0 0.0
  %900 = vmatmul.mubr.f32.gmra.mrb[0].mxu0 %v334
  %v901 = vpop.f32.mrb[0].mxu0
  %v902 = vadd.f32 %v160, %v901
  %v903 = vpop.f32.mrb[0].mxu0
  %904 = vmatprep.mubr.f32.mxu0 0.0
  %905 = vmatmul.mubr.f32.gmra.mrb[0].mxu0 %v337
  %v906 = vpop.f32.mrb[0].mxu0
  %v907 = vadd.f32 %v160, %v906
  %v908 = vpop.f32.mrb[0].mxu0
  %909 = vmatprep.mubr.f32.mxu0 0.0
  %910 = vmatmul.mubr.f32.gmra.mrb[0].mxu0 %v340
  %v911 = vpop.f32.mrb[0].mxu0
  %v912 = vadd.f32 %v160, %v911
  %v913 = vpop.f32.mrb[0].mxu0
  %914 = vmatprep.mubr.f32.mxu0 0.0
  %915 = vmatmul.mubr.f32.gmra.mrb[0].mxu0 %v343
  %v916 = vpop.f32.mrb[0].mxu0
  %v917 = vadd.f32 %v160, %v916
  %v918 = vpop.f32.mrb[0].mxu0
  %919 = vmatprep.mubr.f32.mxu0 0.0
  %920 = vmatmul.mubr.f32.gmra.mrb[0].mxu0 %v346
  %v921 = vpop.f32.mrb[0].mxu0
  %v922 = vadd.f32 %v160, %v921
  %v923 = vpop.f32.mrb[0].mxu0
  %924 = vmatprep.mubr.f32.mxu0 0.0
  %925 = vmatmul.mubr.f32.gmra.mrb[0].mxu0 %v349
  %v926 = vpop.f32.mrb[0].mxu0
  %v927 = vadd.f32 %v160, %v926
  %v928 = vpop.f32.mrb[0].mxu0
  %929 = vmatprep.mubr.f32.mxu0 0.0
  %930 = vmatmul.mubr.f32.gmra.mrb[0].mxu0 %v352
  %v931 = vpop.f32.mrb[0].mxu0
  %v932 = vadd.f32 %v160, %v931
  %v933 = vpop.f32.mrb[0].mxu0
  %934 = vmatprep.mubr.f32.mxu0 0.0
  %935 = vmatmul.mubr.f32.gmra.mrb[0].mxu0 %v355
  %v936 = vpop.f32.mrb[0].mxu0
  %v937 = vadd.f32 %v160, %v936
  %v938 = vpop.f32.mrb[0].mxu0
  %939 = vmatprep.mubr.f32.mxu0 0.0
  %940 = vmatmul.mubr.f32.gmra.mrb[0].mxu0 %v358
  %v941 = vpop.f32.mrb[0].mxu0
  %v942 = vadd.f32 %v160, %v941
  %v943 = vpop.f32.mrb[0].mxu0
  %944 = vmatprep.mubr.f32.mxu0 0.0
  %945 = vmatmul.mubr.f32.gmra.mrb[0].mxu0 %v361
  %v946 = vpop.f32.mrb[0].mxu0
  %v947 = vadd.f32 %v160, %v946
  %v948 = vpop.f32.mrb[0].mxu0
  %949 = vmatprep.mubr.f32.mxu0 0.0
  %950 = vmatmul.mubr.f32.gmra.mrb[0].mxu0 %v364
  %v951 = vpop.f32.mrb[0].mxu0
  %v952 = vadd.f32 %v160, %v951
  %v953 = vpop.f32.mrb[0].mxu0
  %954 = vmatprep.mubr.f32.mxu0 0.0
  %955 = vmatmul.mubr.f32.gmra.mrb[0].mxu0 %v367
  %v956 = vpop.f32.mrb[0].mxu0
  %v957 = vadd.f32 %v160, %v956
  %v958 = vpop.f32.mrb[0].mxu0
  %959 = vmatprep.mubr.f32.mxu0 0.0
  %960 = vmatmul.mubr.f32.gmra.mrb[0].mxu0 %v370
  %v961 = vpop.f32.mrb[0].mxu0
  %v962 = vadd.f32 %v160, %v961
  %v963 = vpop.f32.mrb[0].mxu0
  %964 = vmatprep.mubr.f32.mxu0 0.0
  %965 = vmatmul.mubr.f32.gmra.mrb[0].mxu0 %v373
  %v966 = vpop.f32.mrb[0].mxu0
  %v967 = vadd.f32 %v160, %v966
  %v968 = vpop.f32.mrb[0].mxu0
  %969 = vmatprep.mubr.f32.mxu0 0.0
  %970 = vmatmul.mubr.f32.gmra.mrb[0].mxu0 %v376
  %v971 = vpop.f32.mrb[0].mxu0
  %v972 = vadd.f32 %v160, %v971
  %v973 = vpop.f32.mrb[0].mxu0
  %974 = vmatprep.mubr.f32.mxu0 0.0
  %975 = vmatmul.mubr.f32.gmra.mrb[0].mxu0 %v379
  %v976 = vpop.f32.mrb[0].mxu0
  %v977 = vadd.f32 %v160, %v976
  %v978 = vpop.f32.mrb[0].mxu0
  %979 = vmatprep.mubr.f32.mxu0 0.0
  %980 = vmatmul.mubr.f32.gmra.mrb[0].mxu0 %v382
  %v981 = vpop.f32.mrb[0].mxu0
  %v982 = vadd.f32 %v160, %v981
  %v983 = vpop.f32.mrb[0].mxu0
  %984 = vmatprep.mubr.f32.mxu0 0.0
  %985 = vmatmul.mubr.f32.gmra.mrb[0].mxu0 %v385
  %v986 = vpop.f32.mrb[0].mxu0
  %v987 = vadd.f32 %v160, %v986
  %v988 = vpop.f32.mrb[0].mxu0
  %989 = vmatprep.mubr.f32.mxu0 0.0
  %990 = vmatmul.mubr.f32.gmra.mrb[0].mxu0 %v388
  %v991 = vpop.f32.mrb[0].mxu0
  %v992 = vadd.f32 %v160, %v991
  %v993 = vpop.f32.mrb[0].mxu0
  %994 = vmatprep.mubr.f32.mxu0 0.0
  %995 = vmatmul.mubr.f32.gmra.mrb[0].mxu0 %v391
  %v996 = vpop.f32.mrb[0].mxu0
  %v997 = vadd.f32 %v160, %v996
  %v998 = vpop.f32.mrb[0].mxu0
  %999 = vmatprep.mubr.f32.mxu0 0.0
  %1000 = vmatmul.mubr.f32.gmra.mrb[0].mxu0 %v394
  %v1001 = vpop.f32.mrb[0].mxu0
  %v1002 = vadd.f32 %v160, %v1001
  %v1003 = vpop.f32.mrb[0].mxu0
  %1004 = vmatprep.mubr.f32.mxu0 0.0
  %1005 = vmatmul.mubr.f32.gmra.mrb[0].mxu0 %v397
  %v1006 = vpop.f32.mrb[0].mxu0
  %v1007 = vadd.f32 %v160, %v1006
  %v1008 = vpop.f32.mrb[0].mxu0
  %1009 = vmatprep.mubr.f32.mxu0 0.0
  %1010 = vmatmul.mubr.f32.gmra.mrb[0].mxu0 %v400
  %v1011 = vpop.f32.mrb[0].mxu0
  %v1012 = vadd.f32 %v160, %v1011
  %v1013 = vpop.f32.mrb[0].mxu0
  %1014 = vmatprep.mubr.f32.mxu0 0.0
  %1015 = vmatmul.mubr.f32.gmra.mrb[0].mxu0 %v403
  %v1016 = vpop.f32.mrb[0].mxu0
  %v1017 = vadd.f32 %v160, %v1016
  %v1018 = vpop.f32.mrb[0].mxu0
  %1019 = vmatprep.mubr.f32.mxu0 0.0
  %1020 = vmatmul.mubr.f32.gmra.mrb[0].mxu0 %v406
  %v1021 = vpop.f32.mrb[0].mxu0
  %v1022 = vadd.f32 %v160, %v1021
  %v1023 = vpop.f32.mrb[0].mxu0
  %1024 = vmatprep.mubr.f32.mxu0 0.0
  %1025 = vmatmul.mubr.f32.gmra.mrb[0].mxu0 %v409
  %v1026 = vpop.f32.mrb[0].mxu0
  %v1027 = vadd.f32 %v160, %v1026
  %v1028 = vpop.f32.mrb[0].mxu0
  %1029 = vmatprep.mubr.f32.mxu0 0.0
  %1030 = vmatmul.mubr.f32.gmra.mrb[0].mxu0 %v412
  %v1031 = vpop.f32.mrb[0].mxu0
  %v1032 = vadd.f32 %v160, %v1031
  %v1033 = vpop.f32.mrb[0].mxu0
  %1034 = vmatprep.mubr.f32.mxu0 0.0
  %1035 = vmatmul.mubr.f32.gmra.mrb[0].mxu0 %v415
  %v1036 = vpop.f32.mrb[0].mxu0
  %v1037 = vadd.f32 %v160, %v1036
  %v1038 = vpop.f32.mrb[0].mxu0
  %1039 = vmatprep.mubr.f32.mxu0 0.0
  %1040 = vmatmul.mubr.f32.gmra.mrb[0].mxu0 %v418
  %v1041 = vpop.f32.mrb[0].mxu0
  %v1042 = vadd.f32 %v160, %v1041
  %v1043 = vpop.f32.mrb[0].mxu0
  %1044 = vmatprep.mubr.f32.mxu0 0.0
  %1045 = vmatmul.mubr.f32.gmra.mrb[0].mxu0 %v421
  %v1046 = vpop.f32.mrb[0].mxu0
  %v1047 = vadd.f32 %v160, %v1046
  %v1048 = vpop.f32.mrb[0].mxu0
  %1049 = vmatprep.mubr.f32.mxu0 0.0
  %1050 = vmatmul.mubr.f32.gmra.mrb[0].mxu0 %v424
  %v1051 = vpop.f32.mrb[0].mxu0
  %v1052 = vadd.f32 %v160, %v1051
  %v1053 = vpop.f32.mrb[0].mxu0
  %1054 = vmatprep.mubr.f32.mxu0 0.0
  %1055 = vmatmul.mubr.f32.gmra.mrb[0].mxu0 %v427
  %v1056 = vpop.f32.mrb[0].mxu0
  %v1057 = vadd.f32 %v160, %v1056
  %v1058 = vpop.f32.mrb[0].mxu0
  %1059 = vmatprep.mubr.f32.mxu0 0.0
  %1060 = vmatmul.mubr.f32.gmra.mrb[0].mxu0 %v430
  %v1061 = vpop.f32.mrb[0].mxu0
  %v1062 = vadd.f32 %v160, %v1061
  %v1063 = vpop.f32.mrb[0].mxu0
  %1064 = vmatprep.mubr.f32.mxu0 0.0
  %1065 = vmatmul.mubr.f32.gmra.mrb[0].mxu0 %v433
  %v1066 = vpop.f32.mrb[0].mxu0
  %v1067 = vadd.f32 %v160, %v1066
  %v1068 = vpop.f32.mrb[0].mxu0
  %1069 = vmatprep.mubr.f32.mxu0 0.0
  %1070 = vmatmul.mubr.f32.gmra.mrb[0].mxu0 %v436
  %v1071 = vpop.f32.mrb[0].mxu0
  %v1072 = vadd.f32 %v160, %v1071
  %v1073 = vpop.f32.mrb[0].mxu0
  %1074 = vmatprep.mubr.f32.mxu0 0.0
  %1075 = vmatmul.mubr.f32.gmra.mrb[0].mxu0 %v439
  %v1076 = vpop.f32.mrb[0].mxu0
  %v1077 = vadd.f32 %v160, %v1076
  %v1078 = vpop.f32.mrb[0].mxu0
  %1079 = vmatprep.mubr.f32.mxu0 0.0
  %1080 = vmatmul.mubr.f32.gmra.mrb[0].mxu0 %v442
  %v1081 = vpop.f32.mrb[0].mxu0
  %v1082 = vadd.f32 %v160, %v1081
  %v1083 = vpop.f32.mrb[0].mxu0
  %1084 = vmatprep.mubr.f32.mxu0 0.0
  %1085 = vmatmul.mubr.f32.gmra.mrb[0].mxu0 %v445
  %v1086 = vpop.f32.mrb[0].mxu0
  %v1087 = vadd.f32 %v160, %v1086
  %v1088 = vpop.f32.mrb[0].mxu0
  %1089 = vmatprep.mubr.f32.mxu0 0.0
  %1090 = vmatmul.mubr.f32.gmra.mrb[0].mxu0 %v448
  %v1091 = vpop.f32.mrb[0].mxu0
  %v1092 = vadd.f32 %v160, %v1091
  %v1093 = vpop.f32.mrb[0].mxu0
  %1094 = vmatprep.mubr.f32.mxu0 0.0
  %1095 = vmatmul.mubr.f32.gmra.mrb[0].mxu0 %v451
  %v1096 = vpop.f32.mrb[0].mxu0
  %v1097 = vadd.f32 %v160, %v1096
  %v1098 = vpop.f32.mrb[0].mxu0
  %1099 = vmatprep.mubr.f32.mxu0 0.0
  %1100 = vmatmul.mubr.f32.gmra.mrb[0].mxu0 %v454
  %v1101 = vpop.f32.mrb[0].mxu0
  %v1102 = vadd.f32 %v160, %v1101
  %v1103 = vpop.f32.mrb[0].mxu0
  %1104 = vmatprep.mubr.f32.mxu0 0.0
  %1105 = vmatmul.mubr.f32.gmra.mrb[0].mxu0 %v457
  %v1106 = vpop.f32.mrb[0].mxu0
  %v1107 = vadd.f32 %v160, %v1106
  %v1108 = vpop.f32.mrb[0].mxu0
  %1109 = vmatprep.mubr.f32.mxu0 0.0
  %1110 = vmatmul.mubr.f32.gmra.mrb[0].mxu0 %v460
  %v1111 = vpop.f32.mrb[0].mxu0
  %v1112 = vadd.f32 %v160, %v1111
  %v1113 = vpop.f32.mrb[0].mxu0
  %1114 = vmatprep.mubr.f32.mxu0 0.0
  %1115 = vmatmul.mubr.f32.gmra.mrb[0].mxu0 %v463
  %v1116 = vpop.f32.mrb[0].mxu0
  %v1117 = vadd.f32 %v160, %v1116
  %v1118 = vpop.f32.mrb[0].mxu0
  %1119 = vmatprep.mubr.f32.mxu0 0.0
  %1120 = vmatmul.mubr.f32.gmra.mrb[0].mxu0 %v466
  %v1121 = vpop.f32.mrb[0].mxu0
  %v1122 = vadd.f32 %v160, %v1121
  %v1123 = vpop.f32.mrb[0].mxu0
  %1124 = vmatprep.mubr.f32.mxu0 0.0
  %1125 = vmatmul.mubr.f32.gmra.mrb[0].mxu0 %v469
  %v1126 = vpop.f32.mrb[0].mxu0
  %v1127 = vadd.f32 %v160, %v1126
  %v1128 = vpop.f32.mrb[0].mxu0
  %1129 = vmatprep.mubr.f32.mxu0 0.0
  %1130 = vmatmul.mubr.f32.gmra.mrb[0].mxu0 %v472
  %v1131 = vpop.f32.mrb[0].mxu0
  %v1132 = vadd.f32 %v160, %v1131
  %v1133 = vpop.f32.mrb[0].mxu0
  %1134 = vmatprep.mubr.f32.mxu0 0.0
  %1135 = vmatmul.mubr.f32.gmra.mrb[0].mxu0 %v475
  %v1136 = vpop.f32.mrb[0].mxu0
  %v1137 = vadd.f32 %v160, %v1136
  %v1138 = vpop.f32.mrb[0].mxu0
  %1139 = vmatprep.mubr.f32.mxu0 0.0
  %1140 = vmatmul.mubr.f32.gmra.mrb[0].mxu0 %v478
  %v1141 = vpop.f32.mrb[0].mxu0
  %v1142 = vadd.f32 %v160, %v1141
  %v1143 = vpop.f32.mrb[0].mxu0
  %1144 = vmatprep.mubr.f32.mxu0 0.0
  %1145 = vmatmul.mubr.f32.gmra.mrb[0].mxu0 %v481
  %v1146 = vpop.f32.mrb[0].mxu0
  %v1147 = vadd.f32 %v160, %v1146
  %v1148 = vpop.f32.mrb[0].mxu0
  %1149 = vmatprep.mubr.f32.mxu0 0.0
  %1150 = vmatmul.mubr.f32.gmra.mrb[0].mxu0 %v484
  %v1151 = vpop.f32.mrb[0].mxu0
  %v1152 = vadd.f32 %v160, %v1151
  %v1153 = vpop.f32.mrb[0].mxu0
  %1154 = vmatprep.mubr.f32.mxu0 0.0
  %1155 = vmatmul.mubr.f32.gmra.mrb[0].mxu0 %v487
  %v1156 = vpop.f32.mrb[0].mxu0
  %v1157 = vadd.f32 %v160, %v1156
  %v1158 = vpop.f32.mrb[0].mxu0
  %1159 = vmatprep.mubr.f32.mxu0 0.0
  %1160 = vmatmul.mubr.f32.gmra.mrb[0].mxu0 %v490
  %v1161 = vpop.f32.mrb[0].mxu0
  %v1162 = vadd.f32 %v160, %v1161
  %v1163 = vpop.f32.mrb[0].mxu0
  %1164 = vmatprep.mubr.f32.mxu0 0.0
  %1165 = vmatmul.mubr.f32.gmra.mrb[0].mxu0 %v493
  %v1166 = vpop.f32.mrb[0].mxu0
  %v1167 = vadd.f32 %v160, %v1166
  %v1168 = vpop.f32.mrb[0].mxu0
  %1169 = vmatprep.mubr.f32.mxu0 0.0
  %1170 = vmatmul.mubr.f32.gmra.mrb[0].mxu0 %v496
  %v1171 = vpop.f32.mrb[0].mxu0
  %v1172 = vadd.f32 %v160, %v1171
  %v1173 = vpop.f32.mrb[0].mxu0
  %1174 = vmatprep.mubr.f32.mxu0 0.0
  %1175 = vmatmul.mubr.f32.gmra.mrb[0].mxu0 %v499
  %v1176 = vpop.f32.mrb[0].mxu0
  %v1177 = vadd.f32 %v160, %v1176
  %v1178 = vpop.f32.mrb[0].mxu0
  %1179 = vmatprep.mubr.f32.mxu0 0.0
  %1180 = vmatmul.mubr.f32.gmra.mrb[0].mxu0 %v502
  %v1181 = vpop.f32.mrb[0].mxu0
  %v1182 = vadd.f32 %v160, %v1181
  %v1183 = vpop.f32.mrb[0].mxu0
  %1184 = vmatprep.mubr.f32.mxu0 0.0
  %1185 = vmatmul.mubr.f32.gmra.mrb[0].mxu0 %v505
  %v1186 = vpop.f32.mrb[0].mxu0
  %v1187 = vadd.f32 %v160, %v1186
  %v1188 = vpop.f32.mrb[0].mxu0
  %1189 = vmatprep.mubr.f32.mxu0 0.0
  %1190 = vmatmul.mubr.f32.gmra.mrb[0].mxu0 %v508
  %v1191 = vpop.f32.mrb[0].mxu0
  %v1192 = vadd.f32 %v160, %v1191
  %v1193 = vpop.f32.mrb[0].mxu0
  %1194 = vmatprep.mubr.f32.mxu0 0.0
  %1195 = vmatmul.mubr.f32.gmra.mrb[0].mxu0 %v511
  %v1196 = vpop.f32.mrb[0].mxu0
  %v1197 = vadd.f32 %v160, %v1196
  %v1198 = vpop.f32.mrb[0].mxu0
  %1199 = vmatprep.mubr.f32.mxu0 0.0
  %1200 = vmatmul.mubr.f32.gmra.mrb[0].mxu0 %v514
  %v1201 = vpop.f32.mrb[0].mxu0
  %v1202 = vadd.f32 %v160, %v1201
  %v1203 = vpop.f32.mrb[0].mxu0
  %1204 = vmatprep.mubr.f32.mxu0 0.0
  %1205 = vmatmul.mubr.f32.gmra.mrb[0].mxu0 %v517
  %v1206 = vpop.f32.mrb[0].mxu0
  %v1207 = vadd.f32 %v160, %v1206
  %v1208 = vpop.f32.mrb[0].mxu0
  %1209 = vmatprep.mubr.f32.mxu0 0.0
  %1210 = vmatmul.mubr.f32.gmra.mrb[0].mxu0 %v520
  %v1211 = vpop.f32.mrb[0].mxu0
  %v1212 = vadd.f32 %v160, %v1211
  %v1213 = vpop.f32.mrb[0].mxu0
  %1214 = vmatprep.mubr.f32.mxu0 0.0
  %1215 = vmatmul.mubr.f32.gmra.mrb[0].mxu0 %v523
  %v1216 = vpop.f32.mrb[0].mxu0
  %v1217 = vadd.f32 %v160, %v1216
  %v1218 = vpop.f32.mrb[0].mxu0
  %1219 = vmatprep.mubr.f32.mxu0 0.0
  %1220 = vmatmul.mubr.f32.gmra.mrb[0].mxu0 %v526
  %v1221 = vpop.f32.mrb[0].mxu0
  %v1222 = vadd.f32 %v160, %v1221
  %v1223 = vpop.f32.mrb[0].mxu0
  %1224 = vmatprep.mubr.f32.mxu0 0.0
  %1225 = vmatmul.mubr.f32.gmra.mrb[0].mxu0 %v529
  %v1226 = vpop.f32.mrb[0].mxu0
  %v1227 = vadd.f32 %v160, %v1226
  %v1228 = vpop.f32.mrb[0].mxu0
  %1229 = vmatprep.mubr.f32.mxu0 0.0
  %1230 = vmatmul.mubr.f32.gmra.mrb[0].mxu0 %v532
  %v1231 = vpop.f32.mrb[0].mxu0
  %v1232 = vadd.f32 %v160, %v1231
  %v1233 = vpop.f32.mrb[0].mxu0
  %1234 = vmatprep.mubr.f32.mxu0 0.0
  %1235 = vmatmul.mubr.f32.gmra.mrb[0].mxu0 %v535
  %v1236 = vpop.f32.mrb[0].mxu0
  %v1237 = vadd.f32 %v160, %v1236
  %v1238 = vpop.f32.mrb[0].mxu0
  %1239 = vmatprep.mubr.f32.mxu0 0.0
  %1240 = vmatmul.mubr.f32.gmra.mrb[0].mxu0 %v538
  %v1241 = vpop.f32.mrb[0].mxu0
  %v1242 = vadd.f32 %v160, %v1241
  %v1243 = vpop.f32.mrb[0].mxu0
  %1244 = vmatprep.mubr.f32.mxu0 0.0
  %1245 = vmatmul.mubr.f32.gmra.mrb[0].mxu0 %v541
  %v1246 = vpop.f32.mrb[0].mxu0
  %v1247 = vadd.f32 %v160, %v1246
  %v1248 = vpop.f32.mrb[0].mxu0
  %1249 = vmatprep.mubr.f32.mxu0 0.0
  %1250 = vmatmul.mubr.f32.gmra.mrb[0].mxu0 %v544
  %v1251 = vpop.f32.mrb[0].mxu0
  %v1252 = vadd.f32 %v160, %v1251
  %v1253 = vpop.f32.mrb[0].mxu0
  %1254 = vdwg.mxu0
  %v1255 = vmax.f32 %v617, 0.0
  %v1256 = vmax.f32 %v622, 0.0
  %v1257 = vmax.f32 %v627, 0.0
  %v1258 = vmax.f32 %v632, 0.0
  %v1259 = vmax.f32 %v637, 0.0
  %v1260 = vmax.f32 %v642, 0.0
  %v1261 = vmax.f32 %v647, 0.0
  %v1262 = vmax.f32 %v652, 0.0
  %v1263 = vmax.f32 %v657, 0.0
  %v1264 = vmax.f32 %v662, 0.0
  %v1265 = vmax.f32 %v667, 0.0
  %v1266 = vmax.f32 %v672, 0.0
  %v1267 = vmax.f32 %v677, 0.0
  %v1268 = vmax.f32 %v682, 0.0
  %v1269 = vmax.f32 %v687, 0.0
  %v1270 = vmax.f32 %v692, 0.0
  %v1271 = vmax.f32 %v697, 0.0
  %v1272 = vmax.f32 %v702, 0.0
  %v1273 = vmax.f32 %v707, 0.0
  %v1274 = vmax.f32 %v712, 0.0
  %v1275 = vmax.f32 %v717, 0.0
  %v1276 = vmax.f32 %v722, 0.0
  %v1277 = vmax.f32 %v727, 0.0
  %v1278 = vmax.f32 %v732, 0.0
  %v1279 = vmax.f32 %v737, 0.0
  %v1280 = vmax.f32 %v742, 0.0
  %v1281 = vmax.f32 %v747, 0.0
  %v1282 = vmax.f32 %v752, 0.0
  %v1283 = vmax.f32 %v757, 0.0
  %v1284 = vmax.f32 %v762, 0.0
  %v1285 = vmax.f32 %v767, 0.0
  %v1286 = vmax.f32 %v772, 0.0
  %v1287 = vmax.f32 %v777, 0.0
  %v1288 = vmax.f32 %v782, 0.0
  %v1289 = vmax.f32 %v787, 0.0
  %v1290 = vmax.f32 %v792, 0.0
  %v1291 = vmax.f32 %v797, 0.0
  %v1292 = vmax.f32 %v802, 0.0
  %v1293 = vmax.f32 %v807, 0.0
  %v1294 = vmax.f32 %v812, 0.0
  %v1295 = vmax.f32 %v817, 0.0
  %v1296 = vmax.f32 %v822, 0.0
  %v1297 = vmax.f32 %v827, 0.0
  %v1298 = vmax.f32 %v832, 0.0
  %v1299 = vmax.f32 %v837, 0.0
  %v1300 = vmax.f32 %v842, 0.0
  %v1301 = vmax.f32 %v847, 0.0
  %v1302 = vmax.f32 %v852, 0.0
  %v1303 = vmax.f32 %v857, 0.0
  %v1304 = vmax.f32 %v862, 0.0
  %v1305 = vmax.f32 %v867, 0.0
  %v1306 = vmax.f32 %v872, 0.0
  %v1307 = vmax.f32 %v877, 0.0
  %v1308 = vmax.f32 %v882, 0.0
  %v1309 = vmax.f32 %v887, 0.0
  %v1310 = vmax.f32 %v892, 0.0
  %v1311 = vmax.f32 %v897, 0.0
  %v1312 = vmax.f32 %v902, 0.0
  %v1313 = vmax.f32 %v907, 0.0
  %v1314 = vmax.f32 %v912, 0.0
  %v1315 = vmax.f32 %v917, 0.0
  %v1316 = vmax.f32 %v922, 0.0
  %v1317 = vmax.f32 %v927, 0.0
  %v1318 = vmax.f32 %v932, 0.0
  %v1319 = vmax.f32 %v937, 0.0
  %v1320 = vmax.f32 %v942, 0.0
  %v1321 = vmax.f32 %v947, 0.0
  %v1322 = vmax.f32 %v952, 0.0
  %v1323 = vmax.f32 %v957, 0.0
  %v1324 = vmax.f32 %v962, 0.0
  %v1325 = vmax.f32 %v967, 0.0
  %v1326 = vmax.f32 %v972, 0.0
  %v1327 = vmax.f32 %v977, 0.0
  %v1328 = vmax.f32 %v982, 0.0
  %v1329 = vmax.f32 %v987, 0.0
  %v1330 = vmax.f32 %v992, 0.0
  %v1331 = vmax.f32 %v997, 0.0
  %v1332 = vmax.f32 %v1002, 0.0
  %v1333 = vmax.f32 %v1007, 0.0
  %v1334 = vmax.f32 %v1012, 0.0
  %v1335 = vmax.f32 %v1017, 0.0
  %v1336 = vmax.f32 %v1022, 0.0
  %v1337 = vmax.f32 %v1027, 0.0
  %v1338 = vmax.f32 %v1032, 0.0
  %v1339 = vmax.f32 %v1037, 0.0
  %v1340 = vmax.f32 %v1042, 0.0
  %v1341 = vmax.f32 %v1047, 0.0
  %v1342 = vmax.f32 %v1052, 0.0
  %v1343 = vmax.f32 %v1057, 0.0
  %v1344 = vmax.f32 %v1062, 0.0
  %v1345 = vmax.f32 %v1067, 0.0
  %v1346 = vmax.f32 %v1072, 0.0
  %v1347 = vmax.f32 %v1077, 0.0
  %v1348 = vmax.f32 %v1082, 0.0
  %v1349 = vmax.f32 %v1087, 0.0
  %v1350 = vmax.f32 %v1092, 0.0
  %v1351 = vmax.f32 %v1097, 0.0
  %v1352 = vmax.f32 %v1102, 0.0
  %v1353 = vmax.f32 %v1107, 0.0
  %v1354 = vmax.f32 %v1112, 0.0
  %v1355 = vmax.f32 %v1117, 0.0
  %v1356 = vmax.f32 %v1122, 0.0
  %v1357 = vmax.f32 %v1127, 0.0
  %v1358 = vmax.f32 %v1132, 0.0
  %v1359 = vmax.f32 %v1137, 0.0
  %v1360 = vmax.f32 %v1142, 0.0
  %v1361 = vmax.f32 %v1147, 0.0
  %v1362 = vmax.f32 %v1152, 0.0
  %v1363 = vmax.f32 %v1157, 0.0
  %v1364 = vmax.f32 %v1162, 0.0
  %v1365 = vmax.f32 %v1167, 0.0
  %v1366 = vmax.f32 %v1172, 0.0
  %v1367 = vmax.f32 %v1177, 0.0
  %v1368 = vmax.f32 %v1182, 0.0
  %v1369 = vmax.f32 %v1187, 0.0
  %v1370 = vmax.f32 %v1192, 0.0
  %v1371 = vmax.f32 %v1197, 0.0
  %v1372 = vmax.f32 %v1202, 0.0
  %v1373 = vmax.f32 %v1207, 0.0
  %v1374 = vmax.f32 %v1212, 0.0
  %v1375 = vmax.f32 %v1217, 0.0
  %v1376 = vmax.f32 %v1222, 0.0
  %v1377 = vmax.f32 %v1227, 0.0
  %v1378 = vmax.f32 %v1232, 0.0
  %v1379 = vmax.f32 %v1237, 0.0
  %v1380 = vmax.f32 %v1242, 0.0
  %v1381 = vmax.f32 %v1247, 0.0
  %v1382 = vmax.f32 %v1252, 0.0
  %v1383 = vld [vmem:[%s2] sm:$0xff]
  %v1384 = vld [vmem:[%s2 + $0x8] sm:$0xff]
  %v1385 = vld [vmem:[%s2 + $0x10] sm:$0xff]
  %v1386 = vld [vmem:[%s2 + $0x18] sm:$0xff]
  %v1391 = vcombine.high %v1383, %v1383
  %v1392 = vcombine.high %v1384, %v1384
  %v1393 = vcombine.high %v1385, %v1385
  %v1394 = vcombine.high %v1386, %v1386
  %1399 = vmatprep.subr.mxu0 0.0
  %1400 = vmatpush1.msra.mxu0 %v1255
  %1401 = vmatprep.subr.mxu0 0.0
  %1402 = vmatpush1.msra.mxu0 %v1256
  %1403 = vmatprep.subr.mxu0 0.0
  %1404 = vmatpush1.msra.mxu0 %v1257
  %1405 = vmatprep.subr.mxu0 0.0
  %1406 = vmatpush1.msra.mxu0 %v1258
  %1407 = vmatprep.subr.mxu0 0.0
  %1408 = vmatpush1.msra.mxu0 %v1259
  %1409 = vmatprep.subr.mxu0 0.0
  %1410 = vmatpush1.msra.mxu0 %v1260
  %1411 = vmatprep.subr.mxu0 0.0
  %1412 = vmatpush1.msra.mxu0 %v1261
  %1413 = vmatprep.subr.mxu0 0.0
  %1414 = vmatpush1.msra.mxu0 %v1262
  %1415 = vmatprep.subr.mxu0 0.0
  %1416 = vmatpush1.msra.mxu0 %v1263
  %1417 = vmatprep.subr.mxu0 0.0
  %1418 = vmatpush1.msra.mxu0 %v1264
  %1419 = vmatprep.subr.mxu0 0.0
  %1420 = vmatpush1.msra.mxu0 %v1265
  %1421 = vmatprep.subr.mxu0 0.0
  %1422 = vmatpush1.msra.mxu0 %v1266
  %1423 = vmatprep.subr.mxu0 0.0
  %1424 = vmatpush1.msra.mxu0 %v1267
  %1425 = vmatprep.subr.mxu0 0.0
  %1426 = vmatpush1.msra.mxu0 %v1268
  %1427 = vmatprep.subr.mxu0 0.0
  %1428 = vmatpush1.msra.mxu0 %v1269
  %1429 = vmatprep.subr.mxu0 0.0
  %1430 = vmatpush1.msra.mxu0 %v1270
  %1431 = vmatprep.subr.mxu0 0.0
  %1432 = vmatpush1.msra.mxu0 %v1271
  %1433 = vmatprep.subr.mxu0 0.0
  %1434 = vmatpush1.msra.mxu0 %v1272
  %1435 = vmatprep.subr.mxu0 0.0
  %1436 = vmatpush1.msra.mxu0 %v1273
  %1437 = vmatprep.subr.mxu0 0.0
  %1438 = vmatpush1.msra.mxu0 %v1274
  %1439 = vmatprep.subr.mxu0 0.0
  %1440 = vmatpush1.msra.mxu0 %v1275
  %1441 = vmatprep.subr.mxu0 0.0
  %1442 = vmatpush1.msra.mxu0 %v1276
  %1443 = vmatprep.subr.mxu0 0.0
  %1444 = vmatpush1.msra.mxu0 %v1277
  %1445 = vmatprep.subr.mxu0 0.0
  %1446 = vmatpush1.msra.mxu0 %v1278
  %1447 = vmatprep.subr.mxu0 0.0
  %1448 = vmatpush1.msra.mxu0 %v1279
  %1449 = vmatprep.subr.mxu0 0.0
  %1450 = vmatpush1.msra.mxu0 %v1280
  %1451 = vmatprep.subr.mxu0 0.0
  %1452 = vmatpush1.msra.mxu0 %v1281
  %1453 = vmatprep.subr.mxu0 0.0
  %1454 = vmatpush1.msra.mxu0 %v1282
  %1455 = vmatprep.subr.mxu0 0.0
  %1456 = vmatpush1.msra.mxu0 %v1283
  %1457 = vmatprep.subr.mxu0 0.0
  %1458 = vmatpush1.msra.mxu0 %v1284
  %1459 = vmatprep.subr.mxu0 0.0
  %1460 = vmatpush1.msra.mxu0 %v1285
  %1461 = vmatprep.subr.mxu0 0.0
  %1462 = vmatpush1.msra.mxu0 %v1286
  %1463 = vmatprep.mubr.f32.mxu0 %v1391
  %1464 = vmatmul.mubr.f32.gmra.mrb[0].mxu0 %v1383
  %v1465 = vpop.f32.mrb[0].mxu0
  %v1466 = vadd.f32 0.0, %v1465
  %v1467 = vpop.f32.mrb[0].mxu0
  %1468 = vdwg.mxu0
  %1469 = vmatprep.subr.mxu0 0.0
  %1470 = vmatpush1.msra.mxu0 %v1287
  %1471 = vmatprep.subr.mxu0 0.0
  %1472 = vmatpush1.msra.mxu0 %v1288
  %1473 = vmatprep.subr.mxu0 0.0
  %1474 = vmatpush1.msra.mxu0 %v1289
  %1475 = vmatprep.subr.mxu0 0.0
  %1476 = vmatpush1.msra.mxu0 %v1290
  %1477 = vmatprep.subr.mxu0 0.0
  %1478 = vmatpush1.msra.mxu0 %v1291
  %1479 = vmatprep.subr.mxu0 0.0
  %1480 = vmatpush1.msra.mxu0 %v1292
  %1481 = vmatprep.subr.mxu0 0.0
  %1482 = vmatpush1.msra.mxu0 %v1293
  %1483 = vmatprep.subr.mxu0 0.0
  %1484 = vmatpush1.msra.mxu0 %v1294
  %1485 = vmatprep.subr.mxu0 0.0
  %1486 = vmatpush1.msra.mxu0 %v1295
  %1487 = vmatprep.subr.mxu0 0.0
  %1488 = vmatpush1.msra.mxu0 %v1296
  %1489 = vmatprep.subr.mxu0 0.0
  %1490 = vmatpush1.msra.mxu0 %v1297
  %1491 = vmatprep.subr.mxu0 0.0
  %1492 = vmatpush1.msra.mxu0 %v1298
  %1493 = vmatprep.subr.mxu0 0.0
  %1494 = vmatpush1.msra.mxu0 %v1299
  %1495 = vmatprep.subr.mxu0 0.0
  %1496 = vmatpush1.msra.mxu0 %v1300
  %1497 = vmatprep.subr.mxu0 0.0
  %1498 = vmatpush1.msra.mxu0 %v1301
  %1499 = vmatprep.subr.mxu0 0.0
  %1500 = vmatpush1.msra.mxu0 %v1302
  %1501 = vmatprep.subr.mxu0 0.0
  %1502 = vmatpush1.msra.mxu0 %v1303
  %1503 = vmatprep.subr.mxu0 0.0
  %1504 = vmatpush1.msra.mxu0 %v1304
  %1505 = vmatprep.subr.mxu0 0.0
  %1506 = vmatpush1.msra.mxu0 %v1305
  %1507 = vmatprep.subr.mxu0 0.0
  %1508 = vmatpush1.msra.mxu0 %v1306
  %1509 = vmatprep.subr.mxu0 0.0
  %1510 = vmatpush1.msra.mxu0 %v1307
  %1511 = vmatprep.subr.mxu0 0.0
  %1512 = vmatpush1.msra.mxu0 %v1308
  %1513 = vmatprep.subr.mxu0 0.0
  %1514 = vmatpush1.msra.mxu0 %v1309
  %1515 = vmatprep.subr.mxu0 0.0
  %1516 = vmatpush1.msra.mxu0 %v1310
  %1517 = vmatprep.subr.mxu0 0.0
  %1518 = vmatpush1.msra.mxu0 %v1311
  %1519 = vmatprep.subr.mxu0 0.0
  %1520 = vmatpush1.msra.mxu0 %v1312
  %1521 = vmatprep.subr.mxu0 0.0
  %1522 = vmatpush1.msra.mxu0 %v1313
  %1523 = vmatprep.subr.mxu0 0.0
  %1524 = vmatpush1.msra.mxu0 %v1314
  %1525 = vmatprep.subr.mxu0 0.0
  %1526 = vmatpush1.msra.mxu0 %v1315
  %1527 = vmatprep.subr.mxu0 0.0
  %1528 = vmatpush1.msra.mxu0 %v1316
  %1529 = vmatprep.subr.mxu0 0.0
  %1530 = vmatpush1.msra.mxu0 %v1317
  %1531 = vmatprep.subr.mxu0 0.0
  %1532 = vmatpush1.msra.mxu0 %v1318
  %1533 = vmatprep.mubr.f32.mxu0 %v1392
  %1534 = vmatmul.mubr.f32.gmra.mrb[0].mxu0 %v1384
  %v1535 = vpop.f32.mrb[0].mxu0
  %v1536 = vadd.f32 %v1466, %v1535
  %v1537 = vpop.f32.mrb[0].mxu0
  %1538 = vdwg.mxu0
  %1539 = vmatprep.subr.mxu0 0.0
  %1540 = vmatpush1.msra.mxu0 %v1319
  %1541 = vmatprep.subr.mxu0 0.0
  %1542 = vmatpush1.msra.mxu0 %v1320
  %1543 = vmatprep.subr.mxu0 0.0
  %1544 = vmatpush1.msra.mxu0 %v1321
  %1545 = vmatprep.subr.mxu0 0.0
  %1546 = vmatpush1.msra.mxu0 %v1322
  %1547 = vmatprep.subr.mxu0 0.0
  %1548 = vmatpush1.msra.mxu0 %v1323
  %1549 = vmatprep.subr.mxu0 0.0
  %1550 = vmatpush1.msra.mxu0 %v1324
  %1551 = vmatprep.subr.mxu0 0.0
  %1552 = vmatpush1.msra.mxu0 %v1325
  %1553 = vmatprep.subr.mxu0 0.0
  %1554 = vmatpush1.msra.mxu0 %v1326
  %1555 = vmatprep.subr.mxu0 0.0
  %1556 = vmatpush1.msra.mxu0 %v1327
  %1557 = vmatprep.subr.mxu0 0.0
  %1558 = vmatpush1.msra.mxu0 %v1328
  %1559 = vmatprep.subr.mxu0 0.0
  %1560 = vmatpush1.msra.mxu0 %v1329
  %1561 = vmatprep.subr.mxu0 0.0
  %1562 = vmatpush1.msra.mxu0 %v1330
  %1563 = vmatprep.subr.mxu0 0.0
  %1564 = vmatpush1.msra.mxu0 %v1331
  %1565 = vmatprep.subr.mxu0 0.0
  %1566 = vmatpush1.msra.mxu0 %v1332
  %1567 = vmatprep.subr.mxu0 0.0
  %1568 = vmatpush1.msra.mxu0 %v1333
  %1569 = vmatprep.subr.mxu0 0.0
  %1570 = vmatpush1.msra.mxu0 %v1334
  %1571 = vmatprep.subr.mxu0 0.0
  %1572 = vmatpush1.msra.mxu0 %v1335
  %1573 = vmatprep.subr.mxu0 0.0
  %1574 = vmatpush1.msra.mxu0 %v1336
  %1575 = vmatprep.subr.mxu0 0.0
  %1576 = vmatpush1.msra.mxu0 %v1337
  %1577 = vmatprep.subr.mxu0 0.0
  %1578 = vmatpush1.msra.mxu0 %v1338
  %1579 = vmatprep.subr.mxu0 0.0
  %1580 = vmatpush1.msra.mxu0 %v1339
  %1581 = vmatprep.subr.mxu0 0.0
  %1582 = vmatpush1.msra.mxu0 %v1340
  %1583 = vmatprep.subr.mxu0 0.0
  %1584 = vmatpush1.msra.mxu0 %v1341
  %1585 = vmatprep.subr.mxu0 0.0
  %1586 = vmatpush1.msra.mxu0 %v1342
  %1587 = vmatprep.subr.mxu0 0.0
  %1588 = vmatpush1.msra.mxu0 %v1343
  %1589 = vmatprep.subr.mxu0 0.0
  %1590 = vmatpush1.msra.mxu0 %v1344
  %1591 = vmatprep.subr.mxu0 0.0
  %1592 = vmatpush1.msra.mxu0 %v1345
  %1593 = vmatprep.subr.mxu0 0.0
  %1594 = vmatpush1.msra.mxu0 %v1346
  %1595 = vmatprep.subr.mxu0 0.0
  %1596 = vmatpush1.msra.mxu0 %v1347
  %1597 = vmatprep.subr.mxu0 0.0
  %1598 = vmatpush1.msra.mxu0 %v1348
  %1599 = vmatprep.subr.mxu0 0.0
  %1600 = vmatpush1.msra.mxu0 %v1349
  %1601 = vmatprep.subr.mxu0 0.0
  %1602 = vmatpush1.msra.mxu0 %v1350
  %1603 = vmatprep.mubr.f32.mxu0 %v1393
  %1604 = vmatmul.mubr.f32.gmra.mrb[0].mxu0 %v1385
  %v1605 = vpop.f32.mrb[0].mxu0
  %v1606 = vadd.f32 %v1536, %v1605
  %v1607 = vpop.f32.mrb[0].mxu0
  %1608 = vdwg.mxu0
  %1609 = vmatprep.subr.mxu0 0.0
  %1610 = vmatpush1.msra.mxu0 %v1351
  %1611 = vmatprep.subr.mxu0 0.0
  %1612 = vmatpush1.msra.mxu0 %v1352
  %1613 = vmatprep.subr.mxu0 0.0
  %1614 = vmatpush1.msra.mxu0 %v1353
  %1615 = vmatprep.subr.mxu0 0.0
  %1616 = vmatpush1.msra.mxu0 %v1354
  %1617 = vmatprep.subr.mxu0 0.0
  %1618 = vmatpush1.msra.mxu0 %v1355
  %1619 = vmatprep.subr.mxu0 0.0
  %1620 = vmatpush1.msra.mxu0 %v1356
  %1621 = vmatprep.subr.mxu0 0.0
  %1622 = vmatpush1.msra.mxu0 %v1357
  %1623 = vmatprep.subr.mxu0 0.0
  %1624 = vmatpush1.msra.mxu0 %v1358
  %1625 = vmatprep.subr.mxu0 0.0
  %1626 = vmatpush1.msra.mxu0 %v1359
  %1627 = vmatprep.subr.mxu0 0.0
  %1628 = vmatpush1.msra.mxu0 %v1360
  %1629 = vmatprep.subr.mxu0 0.0
  %1630 = vmatpush1.msra.mxu0 %v1361
  %1631 = vmatprep.subr.mxu0 0.0
  %1632 = vmatpush1.msra.mxu0 %v1362
  %1633 = vmatprep.subr.mxu0 0.0
  %1634 = vmatpush1.msra.mxu0 %v1363
  %1635 = vmatprep.subr.mxu0 0.0
  %1636 = vmatpush1.msra.mxu0 %v1364
  %1637 = vmatprep.subr.mxu0 0.0
  %1638 = vmatpush1.msra.mxu0 %v1365
  %1639 = vmatprep.subr.mxu0 0.0
  %1640 = vmatpush1.msra.mxu0 %v1366
  %1641 = vmatprep.subr.mxu0 0.0
  %1642 = vmatpush1.msra.mxu0 %v1367
  %1643 = vmatprep.subr.mxu0 0.0
  %1644 = vmatpush1.msra.mxu0 %v1368
  %1645 = vmatprep.subr.mxu0 0.0
  %1646 = vmatpush1.msra.mxu0 %v1369
  %1647 = vmatprep.subr.mxu0 0.0
  %1648 = vmatpush1.msra.mxu0 %v1370
  %1649 = vmatprep.subr.mxu0 0.0
  %1650 = vmatpush1.msra.mxu0 %v1371
  %1651 = vmatprep.subr.mxu0 0.0
  %1652 = vmatpush1.msra.mxu0 %v1372
  %1653 = vmatprep.subr.mxu0 0.0
  %1654 = vmatpush1.msra.mxu0 %v1373
  %1655 = vmatprep.subr.mxu0 0.0
  %1656 = vmatpush1.msra.mxu0 %v1374
  %1657 = vmatprep.subr.mxu0 0.0
  %1658 = vmatpush1.msra.mxu0 %v1375
  %1659 = vmatprep.subr.mxu0 0.0
  %1660 = vmatpush1.msra.mxu0 %v1376
  %1661 = vmatprep.subr.mxu0 0.0
  %1662 = vmatpush1.msra.mxu0 %v1377
  %1663 = vmatprep.subr.mxu0 0.0
  %1664 = vmatpush1.msra.mxu0 %v1378
  %1665 = vmatprep.subr.mxu0 0.0
  %1666 = vmatpush1.msra.mxu0 %v1379
  %1667 = vmatprep.subr.mxu0 0.0
  %1668 = vmatpush1.msra.mxu0 %v1380
  %1669 = vmatprep.subr.mxu0 0.0
  %1670 = vmatpush1.msra.mxu0 %v1381
  %1671 = vmatprep.subr.mxu0 0.0
  %1672 = vmatpush1.msra.mxu0 %v1382
  %1673 = vmatprep.mubr.f32.mxu0 %v1394
  %1674 = vmatmul.mubr.f32.gmra.mrb[0].mxu0 %v1386
  %v1675 = vpop.f32.mrb[0].mxu0
  %v1676 = vadd.f32 %v1606, %v1675
  %v1677 = vpop.f32.mrb[0].mxu0
  %1678 = vdwg.mxu0
  %v1679 = vlaneseq
  %v1680 = vshrl.u32 %v1679, 7
  %v1681 = vsub.s32 1, %v1680
  %v1682 = vrot.slane %v153, %v1681
  %v1683 = vmul.f32 %v1676, %v1682
  %vm1684 = vcmask 60416
  %v1685 = vsel %vm1684, %v1683, 0.0
  %1686 = vadd.xlane.f32.xlu0 %v1685
  %v1687 = vpop.xlane.xlu0 %1686
  %v1688 = vlaneseq
  %v1689 = vshrl.u32 %v1688, 7
  %v1690 = vsub.s32 2, %v1689
  %v1691 = vrot.slane %v153, %v1690
  %v1692 = vmul.f32 %v156, %v1691
  %vm1693 = vcmask 25600
  %v1694 = vsel %vm1693, %v1692, 0.0
  %1695 = vadd.xlane.f32.xlu0 %v1694
  %v1696 = vpop.xlane.xlu0 %1695
  %v1697 = vlaneseq
  %v1698 = vshrl.u32 %v1697, 7
  %v1699 = vsub.s32 3, %v1698
  %v1700 = vrot.slane %v153, %v1699
  %v1701 = vadd.f32 %v1696, %v1700
  %v1702 = vadd.f32 %v1687, %v1701
  %v1704 = vrot.slane %v1701, 6
  %v1706 = vadd.f32 %v1687, %v1704
  %1708 = vset.pattern.permute.xlu0 0
  %1709 = vperm.xlu0 %1708, %v1702
  %v1710 = vpop.permute.xlu0 %1709
  %v1712 = vlaneseq
  %v1713 = vshrl.u32 %v1712, 7
  %v1714 = vsub.s32 4, %v1713
  %v1715 = vrot.slane %v153, %v1714
  %v1716 = vmul.f32 %v1710, %v1715
  %1718 = vset.pattern.permute.xlu0 0
  %1719 = vperm.xlu0 %1718, %v1706
  %v1720 = vpop.permute.xlu0 %1719
  %v1722 = vlaneseq
  %v1723 = vshrl.u32 %v1722, 7
  %v1724 = vsub.s32 5, %v1723
  %v1725 = vrot.slane %v153, %v1724
  %v1726 = vmul.f32 %v1720, %v1725
  %v1728 = vrot.slane %v1726, 2
  %v1730 = vadd.f32 %v1716, %v1728
  %v1731 = vlaneseq
  %v1732 = vshrl.u32 %v1731, 7
  %v1733 = vsub.s32 6, %v1732
  %v1734 = vrot.slane %v153, %v1733
  %v1735 = vadd.f32 %v1730, %v1734
  %v1736 = vmax.f32 %v1735, 0.0
  %v1737 = vlaneseq
  %v1738 = vshrl.u32 %v1737, 7
  %v1739 = vsub.s32 7, %v1738
  %v1740 = vrot.slane %v153, %v1739
  %v1741 = vmul.f32 %v1736, %v1740
  %vm1742 = vcmask 254976
  %v1743 = vsel %vm1742, %v1741, 0.0
  %1744 = vadd.xlane.f32.xlu0 %v1743
  %v1745 = vpop.xlane.xlu0 %1744
  %v1746 = vadd.f32 %v1745, %v1700
  %1748 = vset.pattern.permute.xlu0 1
  %1749 = vperm.xlu0 %1748, %v1746
  %v1750 = vpop.permute.xlu0 %1749
  %1752 = vst [vmem:[%s5] sm:$0x3] %v1750
  // Predicated region
  $region22: #{diff_from_level_forward.1} parent=0 // pred_check
    _
  $region23: #{diff_from_level_forward.1} parent=0 // pred_check_branch
    %1754 = sbr.rel (0) target = $region25
  $region24: #{diff_from_level_forward.1} parent=0 // pred_region
    _
  $region25: #{diff_from_level_forward.1} parent=0 // pred_fallthru
    _
  // Predicated region
  $region26: #{diff_from_level_forward.1} parent=0 // pred_check
    _
  $region27: #{diff_from_level_forward.1} parent=0 // pred_check_branch
    %1756 = sbr.rel (0) target = $region29
  $region28: #{diff_from_level_forward.1} parent=0 // pred_region
    _
  $region29: #{diff_from_level_forward.1} parent=0 // pred_fallthru
    _

</llo_original>
